<compile_context>
chip_gen: v6e
topology: v6e:2x2x1
jax: 0.10.0
libtpu: 0.0.40
codegen_flags: <defaults>
</compile_context>

<pallas_src>
import numpy as np

import jax
import jax.numpy as jnp
from jax.experimental import pallas as pl
from jax.experimental.pallas import tpu as pltpu

# ---- static configuration ----
B = 2              # batch
L = 64             # sequence length
C_IN = 4           # channels of S_V / S_P / S_P1
BL = B * L         # 128 flattened signal rows
F_ENC = 32         # encoder conv channels
HS = 32            # shared-feature dim before shared_project
FEAT = 30          # projected / distinct feature dim (== target_size 30)
NUM_CLASSES = 3
DH = 16            # attention head dim
PC1 = 8            # physical conv1 out channels
PC2 = 16           # physical conv2 out channels (< 30 -> zero-pad path exercised)
KENC = 3           # encoder conv kernel size (padding 1)
KPHY = 5           # physical conv kernel size (padding 2)
POOL = 4
L1 = L // POOL     # 16 (length after first max pool)
L2 = L1 // POOL    # 4  (length after second max pool)
NP1 = B * L1       # 32 rows after first pool
NTOK = 4           # attention tokens

CONV_IN = 3 * C_IN                       # 12 lanes: [S_V | S_P | S_P1]
CONV_K = KPHY * CONV_IN                  # 60 im2col lanes (5 taps)
CONV_OUT = 2 * F_ENC + PC1               # 72: [vib(32) | press(32) | phys1(8)]
HEAD_OUT = 4 * FEAT                      # 120: [h1 | fvdi | h2 | fpdi]
ATTN_OUT = (2 + NUM_CLASSES) * DH + NUM_CLASSES   # 83: [q|v|k0..k2 | v@fc+bfc]
INV_SQRT_DH = 1.0 / float(DH) ** 0.5


# -------------------- constants-slab layout (row offsets, 8-aligned) --------
_OFF = {}


def _register(layout):
    off = 0
    for name, rows in layout:
        _OFF[name] = off
        off += -(-rows // 8) * 8
    return off


CONST_ROWS = _register([
    ("w_conv", CONV_K), ("b_conv", 1), ("avg_enc", B), ("w_head", CONV_OUT),
    ("b_head", 1), ("sel1", NP1), ("w_phy2", KPHY * PC1), ("b_phy2", 1),
    ("avg_sel2", B), ("w_attn", FEAT), ("b_attn", 1), ("mask_x", BL),
    ("mask_p", NP1), ("a_all", B), ("a_np", B), ("s_sum", B),
    ("seg_sum", NUM_CLASSES * DH), ("tok3", 2 * NTOK),
])  # = 528 rows -> (528, 128) f32 slab, ~270 KB, one DMA


# -------------------- single fused kernel -----------------------------------
def _fused_kernel(data_ref, consts_ref, out_ref):
    def cb(name, rows, cols):                     # static view into the consts slab
        r0 = _OFF[name]
        return consts_ref[r0:r0 + rows, 0:cols]

    x = data_ref[0:BL, :]                         # (128, 12) signals, row = b*L + pos
    pairs = data_ref[BL:BL + B, 0:1]              # (2, 1) runtime pairs indicator

    # ---- stage 1: fused 'same' convs (vib k3 | press k3 | phys1 k5), one matmul ----
    taps = [x if k == 0 else pltpu.roll(x, k, axis=0)
            for k in (2, 1, 0, BL - 1, BL - 2)]            # shifts s = -2..+2
    im2col = jnp.concatenate(taps, axis=-1) * cb("mask_x", BL, CONV_K)   # (128, 60)
    conv = (jnp.dot(im2col, cb("w_conv", CONV_K, CONV_OUT),
                    preferred_element_type=jnp.float32)
            + cb("b_conv", 1, CONV_OUT))                                 # (128, 72)

    # ---- encoders: ReLU -> global mean -> fused heads (+ shared_project folded) ----
    h = jnp.maximum(conv, 0.0)
    pooled = jnp.dot(cb("avg_enc", B, BL), h,
                     preferred_element_type=jnp.float32)                 # (2, 72)
    head = (jnp.dot(pooled, cb("w_head", CONV_OUT, HEAD_OUT),
                    preferred_element_type=jnp.float32)
            + cb("b_head", 1, HEAD_OUT))                                 # (2, 120)
    h1 = head[:, 0:FEAT]                    # projected vibration shared
    fvdi = head[:, FEAT:2 * FEAT]           # vibration distinct
    h2 = head[:, 2 * FEAT:3 * FEAT]         # projected pressure shared
    fpdi = head[:, 3 * FEAT:4 * FEAT]       # pressure distinct

    # ---- physical path: conv1 -> maxpool(4,4) -> conv2 -> maxpool(4,4)+mean ----
    y1 = conv[:, 2 * F_ENC:2 * F_ENC + PC1]                              # (128, 8) pre-ReLU
    m1 = jnp.maximum(jnp.maximum(y1, pltpu.roll(y1, BL - 1, axis=0)),
                     jnp.maximum(pltpu.roll(y1, BL - 2, axis=0),
                                 pltpu.roll(y1, BL - 3, axis=0)))
    pool1 = jnp.dot(cb("sel1", NP1, BL), m1,
                    preferred_element_type=jnp.float32)                  # (32, 8)

    taps2 = [pool1 if k == 0 else pltpu.roll(pool1, k, axis=0)
             for k in (2, 1, 0, NP1 - 1, NP1 - 2)]
    im2 = jnp.concatenate(taps2, axis=-1) * cb("mask_p", NP1, KPHY * PC1)  # (32, 40)
    y2 = (jnp.dot(im2, cb("w_phy2", KPHY * PC1, PC2),
                  preferred_element_type=jnp.float32)
          + cb("b_phy2", 1, PC2))                                        # (32, 16)
    m2 = jnp.maximum(jnp.maximum(y2, pltpu.roll(y2, NP1 - 1, axis=0)),
                     jnp.maximum(pltpu.roll(y2, NP1 - 2, axis=0),
                                 pltpu.roll(y2, NP1 - 3, axis=0)))
    gm = jnp.dot(cb("avg_sel2", B, NP1), m2,
                 preferred_element_type=jnp.float32)                     # (2, 16)
    y30 = jnp.concatenate([gm, jnp.zeros((B, FEAT - PC2), jnp.float32)], axis=-1)

    # ---- logsumexp([h1+h2,h1+h2,h1,h2]) - logsumexp([0,0,h1,h2]), pairs gate ----
    sh = h1 + h2
    ma = jnp.maximum(sh, jnp.maximum(h1, h2))
    lse1 = ma + jnp.log(2.0 * jnp.exp(sh - ma) + jnp.exp(h1 - ma) + jnp.exp(h2 - ma))
    mb = jnp.maximum(jnp.zeros_like(h1), jnp.maximum(h1, h2))
    lse2 = mb + jnp.log(2.0 * jnp.exp(-mb) + jnp.exp(h1 - mb) + jnp.exp(h2 - mb))
    fas = pairs * (lse1 - lse2) + (1.0 - pairs) * h2                     # (2, 30)

    # ---- attention over 4 tokens (rows = 2*token + batch) ----
    tok = jnp.concatenate([fpdi, fas, y30, fvdi], axis=0)                # (8, 30)
    qkv = (jnp.dot(tok, cb("w_attn", FEAT, ATTN_OUT),
                   preferred_element_type=jnp.float32)
           + cb("b_attn", 1, ATTN_OUT))                                  # (8, 83)
    q_all = qkv[:, 0:DH]                                                 # (8, 16)
    k_all = qkv[:, 2 * DH:2 * DH + NUM_CLASSES * DH]                     # (8, 48)
    vw = qkv[:, 2 * DH + NUM_CLASSES * DH:ATTN_OUT]                      # (8, 3) v@fc+bfc folded

    # pairs-gated q_mean in one matmul via a blended precomputed averaging matrix
    a_q = (pairs * cb("a_all", B, 2 * NTOK)
           + (1.0 - pairs) * cb("a_np", B, 2 * NTOK))                    # (2, 8)
    q_mean = jnp.dot(a_q, q_all, preferred_element_type=jnp.float32)     # (2, 16)

    # attention logits for all classes & tokens in one segment-sum matmul
    q_rep = jnp.concatenate([q_mean] * NUM_CLASSES, axis=-1)             # (2, 48)
    q_rep = jnp.concatenate([q_rep] * NTOK, axis=0)                      # (8, 48)
    logits = jnp.dot(k_all * q_rep,
                     cb("seg_sum", NUM_CLASSES * DH, NUM_CLASSES),
                     preferred_element_type=jnp.float32) * INV_SQRT_DH   # (8, 3)

    # mask the last token (fvdi) where pairs < 0.5; large-negative, not -inf
    pairs8 = jnp.concatenate([pairs] * NTOK, axis=0)                     # (8, 1)
    masked = jnp.where(pairs8 < 0.5, jnp.float32(-1e30), jnp.float32(0.0))
    logits = logits + masked * cb("tok3", 2 * NTOK, 1)

    # softmax over tokens + weighted value/fc sum, one selection matmul for num & den
    mx = jnp.max(logits, axis=0, keepdims=True)                          # (1, 3)
    e = jnp.exp(logits - mx)                                             # (8, 3)
    g = jnp.concatenate([e * vw, e], axis=-1)                            # (8, 6)
    nd = jnp.dot(cb("s_sum", B, 2 * NTOK), g,
                 preferred_element_type=jnp.float32)                     # (2, 6)
    pred = nd[:, 0:NUM_CLASSES] / nd[:, NUM_CLASSES:2 * NUM_CLASSES]     # (2, 3)

    # single lane-dense, unmasked (8, 128) store; wrapper slices it back
    padded = jnp.concatenate(
        [pred, jnp.zeros((B, 128 - NUM_CLASSES), jnp.float32)], axis=-1)
    padded = jnp.concatenate(
        [padded, jnp.zeros((8 - B, 128), jnp.float32)], axis=0)
    out_ref[...] = padded


# -------------------- one-time constants packing -----------------------------
def pack_consts(p):
    g = {k: np.asarray(v, np.float32) for k, v in p.items()}
    C = np.zeros((CONST_ROWS, 128), np.float32)

    def put(name, block):
        block = np.asarray(block, np.float32)
        r0 = _OFF[name]
        C[r0:r0 + block.shape[0], :block.shape[1]] = block

    # fused conv weight: im2col tap-major rows, [vib k3 | press k3 | phys1 k5] cols
    wconv = np.zeros((CONV_K, CONV_OUT), np.float32)
    for ti in range(KPHY):
        s = ti - (KPHY // 2)
        r = CONV_IN * ti
        if abs(s) <= KENC // 2:
            m = s + KENC // 2
            wconv[r + 0:r + C_IN, 0:F_ENC] = g["v_wc"][m]
            wconv[r + C_IN:r + 2 * C_IN, F_ENC:2 * F_ENC] = g["p_wc"][m]
        wconv[r + 2 * C_IN:r + 3 * C_IN, 2 * F_ENC:2 * F_ENC + PC1] = g["w_phy1"][ti]
    put("w_conv", wconv)
    put("b_conv", np.concatenate([g["v_bc"].reshape(1, -1), g["p_bc"].reshape(1, -1),
                                  g["b_phy1"].reshape(1, -1)], axis=1))

    # global-average-pool matrix over L per batch
    avg_enc = np.zeros((B, BL), np.float32)
    for b in range(B):
        avg_enc[b, b * L:(b + 1) * L] = 1.0 / L
    put("avg_enc", avg_enc)

    # fused encoder heads, shared_project pre-folded, block-diagonal over vib/press
    w_head = np.zeros((CONV_OUT, HEAD_OUT), np.float32)
    w_head[0:F_ENC, 0:FEAT] = g["v_wsh"] @ g["w_proj"]
    w_head[0:F_ENC, FEAT:2 * FEAT] = g["v_wdi"]
    w_head[F_ENC:2 * F_ENC, 2 * FEAT:3 * FEAT] = g["p_wsh"] @ g["w_proj"]
    w_head[F_ENC:2 * F_ENC, 3 * FEAT:4 * FEAT] = g["p_wdi"]
    put("w_head", w_head)
    put("b_head", np.concatenate(
        [g["v_bsh"] @ g["w_proj"] + g["b_proj"], g["v_bdi"],
         g["p_bsh"] @ g["w_proj"] + g["b_proj"], g["p_bdi"]], axis=1))

    # maxpool(4,4) window-start selector for the first physical pool
    sel1 = np.zeros((NP1, BL), np.float32)
    sel1[np.arange(NP1), POOL * np.arange(NP1)] = 1.0
    put("sel1", sel1)

    # physical conv2 weights (im2col tap-major)
    w2 = np.zeros((KPHY * PC1, PC2), np.float32)
    for ti in range(KPHY):
        w2[PC1 * ti:PC1 * (ti + 1), :] = g["w_phy2"][ti]
    put("w_phy2", w2)
    put("b_phy2", g["b_phy2"].reshape(1, -1))

    # fused maxpool(4,4) + adaptive_avg_pool1d(.,1) selector for the second pool
    avg_sel2 = np.zeros((B, NP1), np.float32)
    for b in range(B):
        avg_sel2[b, b * L1 + POOL * np.arange(L2)] = 1.0 / L2
    put("avg_sel2", avg_sel2)

    # attn_proj with final_pred_fc (diagonal rows) + b_fc pre-folded as 3 extra cols
    w_fc = g["w_fc_t"].T                                     # (DH, NUM_CLASSES)
    w_attn = np.zeros((FEAT, ATTN_OUT), np.float32)
    w_attn[:, 0:(2 + NUM_CLASSES) * DH] = g["w_attn"]
    w_attn[:, (2 + NUM_CLASSES) * DH:] = g["w_attn"][:, DH:2 * DH] @ w_fc
    put("w_attn", w_attn)
    b_attn = np.zeros((1, ATTN_OUT), np.float32)
    b_attn[:, 0:(2 + NUM_CLASSES) * DH] = g["b_attn"]
    b_attn[:, (2 + NUM_CLASSES) * DH:] = g["b_attn"][:, DH:2 * DH] @ w_fc + g["b_fc"]
    put("b_attn", b_attn)

    # batch-boundary masks for the rolled im2col taps ('same' zero padding)
    def tap_mask(n_rows, period, n_lanes):
        mk = np.zeros((n_rows, KPHY * n_lanes), np.float32)
        pos = np.arange(n_rows) % period
        for ti in range(KPHY):
            s = ti - (KPHY // 2)
            ok = ((pos + s) >= 0) & ((pos + s) < period)
            mk[:, n_lanes * ti:n_lanes * (ti + 1)] = ok[:, None].astype(np.float32)
        return mk
    put("mask_x", tap_mask(BL, L, CONV_IN))
    put("mask_p", tap_mask(NP1, L1, PC1))

    # q-mean averaging matrices / token-sum matrix (rows laid out as 2*token + batch)
    a_all = np.zeros((B, 2 * NTOK), np.float32)
    a_np = np.zeros((B, 2 * NTOK), np.float32)
    s_sum = np.zeros((B, 2 * NTOK), np.float32)
    for b in range(B):
        a_all[b, b + 2 * np.arange(NTOK)] = 1.0 / NTOK
        a_np[b, b + 2 * np.arange(NTOK - 1)] = 1.0 / (NTOK - 1)
        s_sum[b, b + 2 * np.arange(NTOK)] = 1.0
    put("a_all", a_all)
    put("a_np", a_np)
    put("s_sum", s_sum)

    # per-class segment-sum matrix for the attention logits
    seg = np.zeros((NUM_CLASSES * DH, NUM_CLASSES), np.float32)
    seg[np.arange(NUM_CLASSES * DH), np.arange(NUM_CLASSES * DH) // DH] = 1.0
    put("seg_sum", seg)

    # indicator column for the last token's rows (token 3 -> rows 6, 7)
    tok3 = np.zeros((2 * NTOK, 1), np.float32)
    tok3[2 * (NTOK - 1):, 0] = 1.0
    put("tok3", tok3)

    return jnp.asarray(C)


# -------------------- wrapper -----------------------------------------------
@jax.jit
def forward(consts, pairs, S_V, S_P, S_P1):
    # pack the three runtime signals + pairs into ONE kernel operand (layout only)
    sig = jnp.concatenate([S_V, S_P, S_P1], axis=-1).astype(jnp.float32)
    sig = sig.reshape(BL, CONV_IN)                                   # (128, 12)
    extra = jnp.zeros((8, CONV_IN), jnp.float32).at[0:B, 0].set(
        pairs.astype(jnp.float32))
    data = jnp.concatenate([sig, extra], axis=0)                     # (136, 12)

    out = pl.pallas_call(
        _fused_kernel,
        out_shape=jax.ShapeDtypeStruct((8, 128), jnp.float32),
    )(data, consts)
    return out[:B, :NUM_CLASSES]


if __name__ == "__main__":
    key = jax.random.PRNGKey(0)
    ks = jax.random.split(key, 26)

    def rnd(i, shape, scale=0.1):
        return scale * jax.random.normal(ks[i], shape, jnp.float32)

    params = {
        # vibration sub-model
        "v_wc": rnd(0, (KENC, C_IN, F_ENC)), "v_bc": rnd(1, (1, F_ENC)),
        "v_wsh": rnd(2, (F_ENC, HS)), "v_bsh": rnd(3, (1, HS)),
        "v_wdi": rnd(4, (F_ENC, FEAT)), "v_bdi": rnd(5, (1, FEAT)),
        # pressure sub-model
        "p_wc": rnd(6, (KENC, C_IN, F_ENC)), "p_bc": rnd(7, (1, F_ENC)),
        "p_wsh": rnd(8, (F_ENC, HS)), "p_bsh": rnd(9, (1, HS)),
        "p_wdi": rnd(10, (F_ENC, FEAT)), "p_bdi": rnd(11, (1, FEAT)),
        # shared_project
        "w_proj": rnd(12, (HS, FEAT)), "b_proj": rnd(13, (1, FEAT)),
        # physical_model convs
        "w_phy1": rnd(14, (KPHY, C_IN, PC1)), "b_phy1": rnd(15, (1, PC1)),
        "w_phy2": rnd(16, (KPHY, PC1, PC2)), "b_phy2": rnd(17, (1, PC2)),
        # attn_proj -> (2 + num_classes) * DH
        "w_attn": rnd(18, (FEAT, (2 + NUM_CLASSES) * DH)),
        "b_attn": rnd(19, (1, (2 + NUM_CLASSES) * DH)),
        # final_pred_fc, weight stored (num_classes, DH) like torch
        "w_fc_t": rnd(20, (NUM_CLASSES, DH)), "b_fc": rnd(21, (1, NUM_CLASSES)),
    }
    consts = pack_consts(params)

    pairs = jnp.array([1.0, 0.0], jnp.float32)                  # (B,)
    S_V = jax.random.normal(ks[22], (B, L, C_IN), jnp.float32)
    S_P = jax.random.normal(ks[23], (B, L, C_IN), jnp.float32)
    S_P1 = jax.random.normal(ks[24], (B, L, C_IN), jnp.float32)

    out = forward(consts, pairs, S_V, S_P, S_P1)
    out = jax.block_until_ready(out)
    assert out.shape == (B, NUM_CLASSES)
    assert bool(jnp.all(jnp.isfinite(out)))
    print("KERNEL_OK")
</pallas_src>

<mosaic_0001>
module attributes {stable_mosaic.version = 11 : i64} {
  func.func @_fused_kernel(%arg0: memref<136x12xf32, #tpu.memory_space<vmem>>, %arg1: memref<528x128xf32, #tpu.memory_space<vmem>>, %arg2: memref<8x128xf32, #tpu.memory_space<vmem>>) attributes {dimension_semantics = [], scalar_prefetch = 0 : i64, scratch_operands = 0 : i64, tpu.core_type = #tpu.core_type<tc>} {
    %c0 = arith.constant 0 : index
    %c0_0 = arith.constant 0 : index
    %0 = vector.load %arg0[%c0, %c0_0] : memref<136x12xf32, #tpu.memory_space<vmem>>, vector<128x12xf32>
    %c128 = arith.constant 128 : index
    %c0_1 = arith.constant 0 : index
    %1 = vector.load %arg0[%c128, %c0_1] : memref<136x12xf32, #tpu.memory_space<vmem>>, vector<2x1xf32>
    %c2_i32 = arith.constant 2 : i32
    %2 = tpu.dynamic_rotate %0 by %c2_i32 dim 0 : vector<128x12xf32>, i32 -> vector<128x12xf32>
    %c1_i32 = arith.constant 1 : i32
    %3 = tpu.dynamic_rotate %0 by %c1_i32 dim 0 : vector<128x12xf32>, i32 -> vector<128x12xf32>
    %c127_i32 = arith.constant 127 : i32
    %4 = tpu.dynamic_rotate %0 by %c127_i32 dim 0 : vector<128x12xf32>, i32 -> vector<128x12xf32>
    %c126_i32 = arith.constant 126 : i32
    %5 = tpu.dynamic_rotate %0 by %c126_i32 dim 0 : vector<128x12xf32>, i32 -> vector<128x12xf32>
    %6 = tpu.concatenate %2, %3, %0, %4, %5 in 1 : vector<128x12xf32>, vector<128x12xf32>, vector<128x12xf32>, vector<128x12xf32>, vector<128x12xf32> -> vector<128x60xf32>
    %c288 = arith.constant 288 : index
    %c0_2 = arith.constant 0 : index
    %7 = vector.load %arg1[%c288, %c0_2] : memref<528x128xf32, #tpu.memory_space<vmem>>, vector<128x60xf32>
    %8 = arith.mulf %6, %7 : vector<128x60xf32>
    %c0_3 = arith.constant 0 : index
    %c0_4 = arith.constant 0 : index
    %9 = vector.load %arg1[%c0_3, %c0_4] : memref<528x128xf32, #tpu.memory_space<vmem>>, vector<60x72xf32>
    %cst = arith.constant dense<0.000000e+00> : vector<128x72xf32>
    %10 = tpu.matmul %8, %9, %cst {dimension_numbers = #tpu.dot_dimension_numbers<[1], [0], [0], [1], [0, 0, 1, 1], [], []>} : vector<128x60xf32>, vector<60x72xf32>, vector<128x72xf32> -> vector<128x72xf32>
    %c64 = arith.constant 64 : index
    %c0_5 = arith.constant 0 : index
    %11 = vector.load %arg1[%c64, %c0_5] : memref<528x128xf32, #tpu.memory_space<vmem>>, vector<1x72xf32>
    %12 = vector.broadcast %11 : vector<1x72xf32> to vector<128x72xf32>
    %13 = arith.addf %10, %12 : vector<128x72xf32>
    %cst_6 = arith.constant 0.000000e+00 : f32
    %14 = vector.broadcast %cst_6 : f32 to vector<128x72xf32>
    %15 = arith.maximumf %13, %14 : vector<128x72xf32>
    %c72 = arith.constant 72 : index
    %c0_7 = arith.constant 0 : index
    %16 = vector.load %arg1[%c72, %c0_7] : memref<528x128xf32, #tpu.memory_space<vmem>>, vector<2x128xf32>
    %cst_8 = arith.constant dense<0.000000e+00> : vector<2x72xf32>
    %17 = tpu.matmul %16, %15, %cst_8 {dimension_numbers = #tpu.dot_dimension_numbers<[1], [0], [0], [1], [0, 0, 1, 1], [], []>} : vector<2x128xf32>, vector<128x72xf32>, vector<2x72xf32> -> vector<2x72xf32>
    %c80 = arith.constant 80 : index
    %c0_9 = arith.constant 0 : index
    %18 = vector.load %arg1[%c80, %c0_9] : memref<528x128xf32, #tpu.memory_space<vmem>>, vector<72x120xf32>
    %cst_10 = arith.constant dense<0.000000e+00> : vector<2x120xf32>
    %19 = tpu.matmul %17, %18, %cst_10 {dimension_numbers = #tpu.dot_dimension_numbers<[1], [0], [0], [1], [0, 0, 1, 1], [], []>} : vector<2x72xf32>, vector<72x120xf32>, vector<2x120xf32> -> vector<2x120xf32>
    %c152 = arith.constant 152 : index
    %c0_11 = arith.constant 0 : index
    %20 = vector.load %arg1[%c152, %c0_11] : memref<528x128xf32, #tpu.memory_space<vmem>>, vector<1x120xf32>
    %21 = vector.broadcast %20 : vector<1x120xf32> to vector<2x120xf32>
    %22 = arith.addf %19, %21 : vector<2x120xf32>
    %23 = vector.extract_strided_slice %22 {offsets = [0, 0], sizes = [2, 30], strides = [1, 1]} : vector<2x120xf32> to vector<2x30xf32>
    %24 = vector.extract_strided_slice %22 {offsets = [0, 30], sizes = [2, 30], strides = [1, 1]} : vector<2x120xf32> to vector<2x30xf32>
    %25 = vector.extract_strided_slice %22 {offsets = [0, 60], sizes = [2, 30], strides = [1, 1]} : vector<2x120xf32> to vector<2x30xf32>
    %26 = vector.extract_strided_slice %22 {offsets = [0, 90], sizes = [2, 30], strides = [1, 1]} : vector<2x120xf32> to vector<2x30xf32>
    %27 = vector.extract_strided_slice %13 {offsets = [0, 64], sizes = [128, 8], strides = [1, 1]} : vector<128x72xf32> to vector<128x8xf32>
    %c127_i32_12 = arith.constant 127 : i32
    %28 = tpu.dynamic_rotate %27 by %c127_i32_12 dim 0 : vector<128x8xf32>, i32 -> vector<128x8xf32>
    %29 = arith.maximumf %27, %28 : vector<128x8xf32>
    %c126_i32_13 = arith.constant 126 : i32
    %30 = tpu.dynamic_rotate %27 by %c126_i32_13 dim 0 : vector<128x8xf32>, i32 -> vector<128x8xf32>
    %c125_i32 = arith.constant 125 : i32
    %31 = tpu.dynamic_rotate %27 by %c125_i32 dim 0 : vector<128x8xf32>, i32 -> vector<128x8xf32>
    %32 = arith.maximumf %30, %31 : vector<128x8xf32>
    %33 = arith.maximumf %29, %32 : vector<128x8xf32>
    %c160 = arith.constant 160 : index
    %c0_14 = arith.constant 0 : index
    %34 = vector.load %arg1[%c160, %c0_14] : memref<528x128xf32, #tpu.memory_space<vmem>>, vector<32x128xf32>
    %cst_15 = arith.constant dense<0.000000e+00> : vector<32x8xf32>
    %35 = tpu.matmul %34, %33, %cst_15 {dimension_numbers = #tpu.dot_dimension_numbers<[1], [0], [0], [1], [0, 0, 1, 1], [], []>} : vector<32x128xf32>, vector<128x8xf32>, vector<32x8xf32> -> vector<32x8xf32>
    %c2_i32_16 = arith.constant 2 : i32
    %36 = tpu.dynamic_rotate %35 by %c2_i32_16 dim 0 : vector<32x8xf32>, i32 -> vector<32x8xf32>
    %c1_i32_17 = arith.constant 1 : i32
    %37 = tpu.dynamic_rotate %35 by %c1_i32_17 dim 0 : vector<32x8xf32>, i32 -> vector<32x8xf32>
    %c31_i32 = arith.constant 31 : i32
    %38 = tpu.dynamic_rotate %35 by %c31_i32 dim 0 : vector<32x8xf32>, i32 -> vector<32x8xf32>
    %c30_i32 = arith.constant 30 : i32
    %39 = tpu.dynamic_rotate %35 by %c30_i32 dim 0 : vector<32x8xf32>, i32 -> vector<32x8xf32>
    %40 = tpu.concatenate %36, %37, %35, %38, %39 in 1 : vector<32x8xf32>, vector<32x8xf32>, vector<32x8xf32>, vector<32x8xf32>, vector<32x8xf32> -> vector<32x40xf32>
    %c416 = arith.constant 416 : index
    %c0_18 = arith.constant 0 : index
    %41 = vector.load %arg1[%c416, %c0_18] : memref<528x128xf32, #tpu.memory_space<vmem>>, vector<32x40xf32>
    %42 = arith.mulf %40, %41 : vector<32x40xf32>
    %c192 = arith.constant 192 : index
    %c0_19 = arith.constant 0 : index
    %43 = vector.load %arg1[%c192, %c0_19] : memref<528x128xf32, #tpu.memory_space<vmem>>, vector<40x16xf32>
    %cst_20 = arith.constant dense<0.000000e+00> : vector<32x16xf32>
    %44 = tpu.matmul %42, %43, %cst_20 {dimension_numbers = #tpu.dot_dimension_numbers<[1], [0], [0], [1], [0, 0, 1, 1], [], []>} : vector<32x40xf32>, vector<40x16xf32>, vector<32x16xf32> -> vector<32x16xf32>
    %c232 = arith.constant 232 : index
    %c0_21 = arith.constant 0 : index
    %45 = vector.load %arg1[%c232, %c0_21] : memref<528x128xf32, #tpu.memory_space<vmem>>, vector<1x16xf32>
    %46 = vector.broadcast %45 : vector<1x16xf32> to vector<32x16xf32>
    %47 = arith.addf %44, %46 : vector<32x16xf32>
    %c31_i32_22 = arith.constant 31 : i32
    %48 = tpu.dynamic_rotate %47 by %c31_i32_22 dim 0 : vector<32x16xf32>, i32 -> vector<32x16xf32>
    %49 = arith.maximumf %47, %48 : vector<32x16xf32>
    %c30_i32_23 = arith.constant 30 : i32
    %50 = tpu.dynamic_rotate %47 by %c30_i32_23 dim 0 : vector<32x16xf32>, i32 -> vector<32x16xf32>
    %c29_i32 = arith.constant 29 : i32
    %51 = tpu.dynamic_rotate %47 by %c29_i32 dim 0 : vector<32x16xf32>, i32 -> vector<32x16xf32>
    %52 = arith.maximumf %50, %51 : vector<32x16xf32>
    %53 = arith.maximumf %49, %52 : vector<32x16xf32>
    %c240 = arith.constant 240 : index
    %c0_24 = arith.constant 0 : index
    %54 = vector.load %arg1[%c240, %c0_24] : memref<528x128xf32, #tpu.memory_space<vmem>>, vector<2x32xf32>
    %cst_25 = arith.constant dense<0.000000e+00> : vector<2x16xf32>
    %55 = tpu.matmul %54, %53, %cst_25 {dimension_numbers = #tpu.dot_dimension_numbers<[1], [0], [0], [1], [0, 0, 1, 1], [], []>} : vector<2x32xf32>, vector<32x16xf32>, vector<2x16xf32> -> vector<2x16xf32>
    %cst_26 = arith.constant 0.000000e+00 : f32
    %56 = vector.broadcast %cst_26 : f32 to vector<2x14xf32>
    %57 = tpu.concatenate %55, %56 in 1 : vector<2x16xf32>, vector<2x14xf32> -> vector<2x30xf32>
    %58 = arith.addf %23, %25 : vector<2x30xf32>
    %59 = arith.maximumf %23, %25 : vector<2x30xf32>
    %60 = arith.maximumf %58, %59 : vector<2x30xf32>
    %61 = arith.subf %58, %60 : vector<2x30xf32>
    %62 = math.exp %61 : vector<2x30xf32>
    %cst_27 = arith.constant 2.000000e+00 : f32
    %63 = vector.broadcast %cst_27 : f32 to vector<2x30xf32>
    %64 = arith.mulf %63, %62 : vector<2x30xf32>
    %65 = arith.subf %23, %60 : vector<2x30xf32>
    %66 = math.exp %65 : vector<2x30xf32>
    %67 = arith.addf %64, %66 : vector<2x30xf32>
    %68 = arith.subf %25, %60 : vector<2x30xf32>
    %69 = math.exp %68 : vector<2x30xf32>
    %70 = arith.addf %67, %69 : vector<2x30xf32>
    %71 = math.log %70 : vector<2x30xf32>
    %72 = arith.addf %60, %71 : vector<2x30xf32>
    %cst_28 = arith.constant 0.000000e+00 : f32
    %73 = vector.broadcast %cst_28 : f32 to vector<2x30xf32>
    %74 = arith.maximumf %23, %25 : vector<2x30xf32>
    %75 = arith.maximumf %73, %74 : vector<2x30xf32>
    %cst_29 = arith.constant 0.000000e+00 : f32
    %76 = vector.broadcast %cst_29 : f32 to vector<2x30xf32>
    %77 = arith.subf %76, %75 : vector<2x30xf32>
    %78 = math.exp %77 : vector<2x30xf32>
    %cst_30 = arith.constant 2.000000e+00 : f32
    %79 = vector.broadcast %cst_30 : f32 to vector<2x30xf32>
    %80 = arith.mulf %79, %78 : vector<2x30xf32>
    %81 = arith.subf %23, %75 : vector<2x30xf32>
    %82 = math.exp %81 : vector<2x30xf32>
    %83 = arith.addf %80, %82 : vector<2x30xf32>
    %84 = arith.subf %25, %75 : vector<2x30xf32>
    %85 = math.exp %84 : vector<2x30xf32>
    %86 = arith.addf %83, %85 : vector<2x30xf32>
    %87 = math.log %86 : vector<2x30xf32>
    %88 = arith.addf %75, %87 : vector<2x30xf32>
    %89 = arith.subf %72, %88 : vector<2x30xf32>
    %90 = vector.broadcast %1 : vector<2x1xf32> to vector<2x30xf32>
    %91 = arith.mulf %90, %89 : vector<2x30xf32>
    %cst_31 = arith.constant 1.000000e+00 : f32
    %92 = vector.broadcast %cst_31 : f32 to vector<2x1xf32>
    %93 = arith.subf %92, %1 : vector<2x1xf32>
    %94 = vector.broadcast %93 : vector<2x1xf32> to vector<2x30xf32>
    %95 = arith.mulf %94, %25 : vector<2x30xf32>
    %96 = arith.addf %91, %95 : vector<2x30xf32>
    %97 = tpu.concatenate %26, %96, %57, %24 in 0 : vector<2x30xf32>, vector<2x30xf32>, vector<2x30xf32>, vector<2x30xf32> -> vector<8x30xf32>
    %c248 = arith.constant 248 : index
    %c0_32 = arith.constant 0 : index
    %98 = vector.load %arg1[%c248, %c0_32] : memref<528x128xf32, #tpu.memory_space<vmem>>, vector<30x83xf32>
    %cst_33 = arith.constant dense<0.000000e+00> : vector<8x83xf32>
    %99 = tpu.matmul %97, %98, %cst_33 {dimension_numbers = #tpu.dot_dimension_numbers<[1], [0], [0], [1], [0, 0, 1, 1], [], []>} : vector<8x30xf32>, vector<30x83xf32>, vector<8x83xf32> -> vector<8x83xf32>
    %c280 = arith.constant 280 : index
    %c0_34 = arith.constant 0 : index
    %100 = vector.load %arg1[%c280, %c0_34] : memref<528x128xf32, #tpu.memory_space<vmem>>, vector<1x83xf32>
    %101 = vector.broadcast %100 : vector<1x83xf32> to vector<8x83xf32>
    %102 = arith.addf %99, %101 : vector<8x83xf32>
    %103 = vector.extract_strided_slice %102 {offsets = [0, 0], sizes = [8, 16], strides = [1, 1]} : vector<8x83xf32> to vector<8x16xf32>
    %104 = vector.extract_strided_slice %102 {offsets = [0, 32], sizes = [8, 48], strides = [1, 1]} : vector<8x83xf32> to vector<8x48xf32>
    %105 = vector.extract_strided_slice %102 {offsets = [0, 80], sizes = [8, 3], strides = [1, 1]} : vector<8x83xf32> to vector<8x3xf32>
    %c448 = arith.constant 448 : index
    %c0_35 = arith.constant 0 : index
    %106 = vector.load %arg1[%c448, %c0_35] : memref<528x128xf32, #tpu.memory_space<vmem>>, vector<2x8xf32>
    %107 = vector.broadcast %1 : vector<2x1xf32> to vector<2x8xf32>
    %108 = arith.mulf %107, %106 : vector<2x8xf32>
    %cst_36 = arith.constant 1.000000e+00 : f32
    %109 = vector.broadcast %cst_36 : f32 to vector<2x1xf32>
    %110 = arith.subf %109, %1 : vector<2x1xf32>
    %c456 = arith.constant 456 : index
    %c0_37 = arith.constant 0 : index
    %111 = vector.load %arg1[%c456, %c0_37] : memref<528x128xf32, #tpu.memory_space<vmem>>, vector<2x8xf32>
    %112 = vector.broadcast %110 : vector<2x1xf32> to vector<2x8xf32>
    %113 = arith.mulf %112, %111 : vector<2x8xf32>
    %114 = arith.addf %108, %113 : vector<2x8xf32>
    %cst_38 = arith.constant dense<0.000000e+00> : vector<2x16xf32>
    %115 = tpu.matmul %114, %103, %cst_38 {dimension_numbers = #tpu.dot_dimension_numbers<[1], [0], [0], [1], [0, 0, 1, 1], [], []>} : vector<2x8xf32>, vector<8x16xf32>, vector<2x16xf32> -> vector<2x16xf32>
    %116 = tpu.concatenate %115, %115, %115 in 1 : vector<2x16xf32>, vector<2x16xf32>, vector<2x16xf32> -> vector<2x48xf32>
    %117 = tpu.concatenate %116, %116, %116, %116 in 0 : vector<2x48xf32>, vector<2x48xf32>, vector<2x48xf32>, vector<2x48xf32> -> vector<8x48xf32>
    %118 = arith.mulf %104, %117 : vector<8x48xf32>
    %c472 = arith.constant 472 : index
    %c0_39 = arith.constant 0 : index
    %119 = vector.load %arg1[%c472, %c0_39] : memref<528x128xf32, #tpu.memory_space<vmem>>, vector<48x3xf32>
    %cst_40 = arith.constant dense<0.000000e+00> : vector<8x3xf32>
    %120 = tpu.matmul %118, %119, %cst_40 {dimension_numbers = #tpu.dot_dimension_numbers<[1], [0], [0], [1], [0, 0, 1, 1], [], []>} : vector<8x48xf32>, vector<48x3xf32>, vector<8x3xf32> -> vector<8x3xf32>
    %cst_41 = arith.constant 2.500000e-01 : f32
    %121 = vector.broadcast %cst_41 : f32 to vector<8x3xf32>
    %122 = arith.mulf %120, %121 : vector<8x3xf32>
    %123 = tpu.concatenate %1, %1, %1, %1 in 0 : vector<2x1xf32>, vector<2x1xf32>, vector<2x1xf32>, vector<2x1xf32> -> vector<8x1xf32>
    %cst_42 = arith.constant 5.000000e-01 : f32
    %124 = vector.broadcast %cst_42 : f32 to vector<8x1xf32>
    %125 = arith.cmpf olt, %123, %124 : vector<8x1xf32>
    %cst_43 = arith.constant -1.000000e+30 : f32
    %cst_44 = arith.constant 0.000000e+00 : f32
    %126 = vector.broadcast %cst_43 : f32 to vector<8x1xf32>
    %127 = vector.broadcast %cst_44 : f32 to vector<8x1xf32>
    %128 = arith.select %125, %126, %127 : vector<8x1xi1>, vector<8x1xf32>
    %c520 = arith.constant 520 : index
    %c0_45 = arith.constant 0 : index
    %129 = vector.load %arg1[%c520, %c0_45] : memref<528x128xf32, #tpu.memory_space<vmem>>, vector<8x1xf32>
    %130 = arith.mulf %128, %129 : vector<8x1xf32>
    %131 = vector.broadcast %130 : vector<8x1xf32> to vector<8x3xf32>
    %132 = arith.addf %122, %131 : vector<8x3xf32>
    %cst_46 = arith.constant dense<0xFF800000> : vector<3xf32>
    %133 = vector.multi_reduction <maximumf>, %132, %cst_46 [0] : vector<8x3xf32> to vector<3xf32>
    %134 = vector.shape_cast %133 : vector<3xf32> to vector<1x3xf32>
    %135 = vector.broadcast %134 : vector<1x3xf32> to vector<8x3xf32>
    %136 = arith.subf %132, %135 : vector<8x3xf32>
    %137 = math.exp %136 : vector<8x3xf32>
    %138 = arith.mulf %137, %105 : vector<8x3xf32>
    %139 = tpu.concatenate %138, %137 in 1 : vector<8x3xf32>, vector<8x3xf32> -> vector<8x6xf32>
    %c464 = arith.constant 464 : index
    %c0_47 = arith.constant 0 : index
    %140 = vector.load %arg1[%c464, %c0_47] : memref<528x128xf32, #tpu.memory_space<vmem>>, vector<2x8xf32>
    %cst_48 = arith.constant dense<0.000000e+00> : vector<2x6xf32>
    %141 = tpu.matmul %140, %139, %cst_48 {dimension_numbers = #tpu.dot_dimension_numbers<[1], [0], [0], [1], [0, 0, 1, 1], [], []>} : vector<2x8xf32>, vector<8x6xf32>, vector<2x6xf32> -> vector<2x6xf32>
    %142 = vector.extract_strided_slice %141 {offsets = [0, 0], sizes = [2, 3], strides = [1, 1]} : vector<2x6xf32> to vector<2x3xf32>
    %143 = vector.extract_strided_slice %141 {offsets = [0, 3], sizes = [2, 3], strides = [1, 1]} : vector<2x6xf32> to vector<2x3xf32>
    %144 = arith.divf %142, %143 : vector<2x3xf32>
    %cst_49 = arith.constant 0.000000e+00 : f32
    %145 = vector.broadcast %cst_49 : f32 to vector<2x125xf32>
    %146 = tpu.concatenate %144, %145 in 1 : vector<2x3xf32>, vector<2x125xf32> -> vector<2x128xf32>
    %cst_50 = arith.constant 0.000000e+00 : f32
    %147 = vector.broadcast %cst_50 : f32 to vector<6x128xf32>
    %148 = tpu.concatenate %146, %147 in 0 : vector<2x128xf32>, vector<6x128xf32> -> vector<8x128xf32>
    %c0_51 = arith.constant 0 : index
    %c0_52 = arith.constant 0 : index
    %149 = vector.load %arg2[%c0_51, %c0_52] : memref<8x128xf32, #tpu.memory_space<vmem>>, vector<8x128xf32>
    tpu.vector_store %arg2[%c0_51, %c0_52], %148 {strides = array<i32>} : memref<8x128xf32, #tpu.memory_space<vmem>>, vector<8x128xf32>,
    return
  }
}

</mosaic_0001>

<llo_original>
// kernel: forward.1
$region0: #{forward.1}
  #allocation0 [shape = 'u32[]', space=smem, size = 0x4, offset = 0x4, fixed_abs, tag = 'smem constant byte address 0x4 - core index']
  #allocation1 [shape = 'u32[144,128]{1,0:T(1,128)}', space=vmem, size = 0x12000, scoped, tag = 'internal scratch']
  %s0 = inlined_call_operand.vmem [shape: f32[136,12], index: 0, kind: input, shape index: {}]
  %s1 = inlined_call_operand.hbm [shape: f32[528,128], index: 1, kind: input, shape index: {}]
  %s2 = inlined_call_operand.vmem [shape: f32[8,128], index: 2, kind: output, shape index: {}]
  %s3 = sld [smem:[#allocation0]]
  $region22: #{forward.1} parent=0
    _
  %s5 = ssub.s32 1, %s3
  %s6 = scalar_select 0, %s5, %s3
  $region1: #{forward.1} parent=0
    #allocation2 [shape = 'u8[270336]{0}', space=vmem, size = 0x42000, scoped, tag = 'input window, operand 1, single buffered']
    #allocation3 [shape = 's32[1]{0}', space=sflag, size = 0x4, scoped, tag = 'scoped memory for forward.1']
    %7 = vsyncpa [#allocation3], 0
    // Predicated region
    $region2: #{forward.1} parent=1 // pred_check
      _
    $region3: #{forward.1} parent=1 // pred_check_branch
      %9 = sbr.rel (0) target = $region5
    $region4: #{forward.1} parent=1 // pred_region
      _
    $region5: #{forward.1} parent=1 // pred_fallthru
      _
    // Predicated region
    $region6: #{forward.1} parent=1 // pred_check
      _
    $region7: #{forward.1} parent=1 // pred_check_branch
      %11 = sbr.rel (0) target = $region9
    $region8: #{forward.1} parent=1 // pred_region
      %s13 = ssub.s32 8448, 8448
      %14 = vsyncadd [#allocation3], %s13
      %s15 = sshll.u32 [#allocation2], 4
      %s16 = int_to_ptr.vmem [resolvable:$true] %s15
      %21 = dma.hbm_to_vmem [thread:$0]  %s1, 8448, %s16, [#allocation3], 128, 128, 8
    $region9: #{forward.1} parent=1 // pred_fallthru
      _
    // Predicated region
    $region10: #{forward.1} parent=1 // pred_check
      _
    $region11: #{forward.1} parent=1 // pred_check_branch
      %23 = sbr.rel (0) target = $region13
    $region12: #{forward.1} parent=1 // pred_region
      %24 = dma.done [#allocation3], 8448
    $region13: #{forward.1} parent=1 // pred_fallthru
      _
    %v25 = vld [vmem:[%s0] sm:$0xff]
    %v26 = vld [vmem:[%s0 + $0x8] sm:$0xff]
    %v27 = vld [vmem:[%s0 + $0x10] sm:$0xff]
    %v28 = vld [vmem:[%s0 + $0x18] sm:$0xff]
    %v29 = vld [vmem:[%s0 + $0x20] sm:$0xff]
    %v30 = vld [vmem:[%s0 + $0x28] sm:$0xff]
    %v31 = vld [vmem:[%s0 + $0x30] sm:$0xff]
    %v32 = vld [vmem:[%s0 + $0x38] sm:$0xff]
    %v33 = vld [vmem:[%s0 + $0x40] sm:$0xff]
    %v34 = vld [vmem:[%s0 + $0x48] sm:$0xff]
    %v35 = vld [vmem:[%s0 + $0x50] sm:$0xff]
    %v36 = vld [vmem:[%s0 + $0x58] sm:$0xff]
    %v37 = vld [vmem:[%s0 + $0x60] sm:$0xff]
    %v38 = vld [vmem:[%s0 + $0x68] sm:$0xff]
    %v39 = vld [vmem:[%s0 + $0x70] sm:$0xff]
    %v40 = vld [vmem:[%s0 + $0x78] sm:$0xff]
    %v41 = vld [vmem:[%s0 + $0x80] sm:$0x3]
    %v42 = vrot.slane %v25, 6
    %v43 = vrot.slane %v26, 6
    %v44 = vrot.slane %v27, 6
    %v45 = vrot.slane %v28, 6
    %v46 = vrot.slane %v29, 6
    %v47 = vrot.slane %v30, 6
    %v48 = vrot.slane %v31, 6
    %v49 = vrot.slane %v32, 6
    %v50 = vrot.slane %v33, 6
    %v51 = vrot.slane %v34, 6
    %v52 = vrot.slane %v35, 6
    %v53 = vrot.slane %v36, 6
    %v54 = vrot.slane %v37, 6
    %v55 = vrot.slane %v38, 6
    %v56 = vrot.slane %v39, 6
    %v57 = vrot.slane %v40, 6
    %v58 = vlaneseq
    %v59 = vshrl.u32 %v58, 7
    %vm60 = vcmp.lt.s32.totalorder %v59, 2
    %v61 = vsel %vm60, %v56, %v57
    %v62 = vsel %vm60, %v55, %v56
    %v63 = vsel %vm60, %v54, %v55
    %v64 = vsel %vm60, %v53, %v54
    %v65 = vsel %vm60, %v52, %v53
    %v66 = vsel %vm60, %v51, %v52
    %v67 = vsel %vm60, %v50, %v51
    %v68 = vsel %vm60, %v49, %v50
    %v69 = vsel %vm60, %v48, %v49
    %v70 = vsel %vm60, %v47, %v48
    %v71 = vsel %vm60, %v46, %v47
    %v72 = vsel %vm60, %v45, %v46
    %v73 = vsel %vm60, %v44, %v45
    %v74 = vsel %vm60, %v43, %v44
    %v75 = vsel %vm60, %v42, %v43
    %v76 = vsel %vm60, %v57, %v42
    %v77 = vrot.slane %v25, 7
    %v78 = vrot.slane %v26, 7
    %v79 = vrot.slane %v27, 7
    %v80 = vrot.slane %v28, 7
    %v81 = vrot.slane %v29, 7
    %v82 = vrot.slane %v30, 7
    %v83 = vrot.slane %v31, 7
    %v84 = vrot.slane %v32, 7
    %v85 = vrot.slane %v33, 7
    %v86 = vrot.slane %v34, 7
    %v87 = vrot.slane %v35, 7
    %v88 = vrot.slane %v36, 7
    %v89 = vrot.slane %v37, 7
    %v90 = vrot.slane %v38, 7
    %v91 = vrot.slane %v39, 7
    %v92 = vrot.slane %v40, 7
    %vm93 = vcmp.lt.s32.totalorder %v59, 1
    %v94 = vsel %vm93, %v91, %v92
    %v95 = vsel %vm93, %v90, %v91
    %v96 = vsel %vm93, %v89, %v90
    %v97 = vsel %vm93, %v88, %v89
    %v98 = vsel %vm93, %v87, %v88
    %v99 = vsel %vm93, %v86, %v87
    %v100 = vsel %vm93, %v85, %v86
    %v101 = vsel %vm93, %v84, %v85
    %v102 = vsel %vm93, %v83, %v84
    %v103 = vsel %vm93, %v82, %v83
    %v104 = vsel %vm93, %v81, %v82
    %v105 = vsel %vm93, %v80, %v81
    %v106 = vsel %vm93, %v79, %v80
    %v107 = vsel %vm93, %v78, %v79
    %v108 = vsel %vm93, %v77, %v78
    %v109 = vsel %vm93, %v92, %v77
    %v110 = vrot.slane %v25, 1
    %v111 = vrot.slane %v26, 1
    %v112 = vrot.slane %v27, 1
    %v113 = vrot.slane %v28, 1
    %v114 = vrot.slane %v29, 1
    %v115 = vrot.slane %v30, 1
    %v116 = vrot.slane %v31, 1
    %v117 = vrot.slane %v32, 1
    %v118 = vrot.slane %v33, 1
    %v119 = vrot.slane %v34, 1
    %v120 = vrot.slane %v35, 1
    %v121 = vrot.slane %v36, 1
    %v122 = vrot.slane %v37, 1
    %v123 = vrot.slane %v38, 1
    %v124 = vrot.slane %v39, 1
    %v125 = vrot.slane %v40, 1
    %vm126 = vcmp.lt.s32.totalorder %v59, 7
    %v127 = vsel %vm126, %v124, %v125
    %v128 = vsel %vm126, %v123, %v124
    %v129 = vsel %vm126, %v122, %v123
    %v130 = vsel %vm126, %v121, %v122
    %v131 = vsel %vm126, %v120, %v121
    %v132 = vsel %vm126, %v119, %v120
    %v133 = vsel %vm126, %v118, %v119
    %v134 = vsel %vm126, %v117, %v118
    %v135 = vsel %vm126, %v116, %v117
    %v136 = vsel %vm126, %v115, %v116
    %v137 = vsel %vm126, %v114, %v115
    %v138 = vsel %vm126, %v113, %v114
    %v139 = vsel %vm126, %v112, %v113
    %v140 = vsel %vm126, %v111, %v112
    %v141 = vsel %vm126, %v110, %v111
    %v142 = vsel %vm126, %v125, %v110
    %v143 = vrot.slane %v25, 2
    %v144 = vrot.slane %v26, 2
    %v145 = vrot.slane %v27, 2
    %v146 = vrot.slane %v28, 2
    %v147 = vrot.slane %v29, 2
    %v148 = vrot.slane %v30, 2
    %v149 = vrot.slane %v31, 2
    %v150 = vrot.slane %v32, 2
    %v151 = vrot.slane %v33, 2
    %v152 = vrot.slane %v34, 2
    %v153 = vrot.slane %v35, 2
    %v154 = vrot.slane %v36, 2
    %v155 = vrot.slane %v37, 2
    %v156 = vrot.slane %v38, 2
    %v157 = vrot.slane %v39, 2
    %v158 = vrot.slane %v40, 2
    %vm159 = vcmp.lt.s32.totalorder %v59, 6
    %v160 = vsel %vm159, %v157, %v158
    %v161 = vsel %vm159, %v156, %v157
    %v162 = vsel %vm159, %v155, %v156
    %v163 = vsel %vm159, %v154, %v155
    %v164 = vsel %vm159, %v153, %v154
    %v165 = vsel %vm159, %v152, %v153
    %v166 = vsel %vm159, %v151, %v152
    %v167 = vsel %vm159, %v150, %v151
    %v168 = vsel %vm159, %v149, %v150
    %v169 = vsel %vm159, %v148, %v149
    %v170 = vsel %vm159, %v147, %v148
    %v171 = vsel %vm159, %v146, %v147
    %v172 = vsel %vm159, %v145, %v146
    %v173 = vsel %vm159, %v144, %v145
    %v174 = vsel %vm159, %v143, %v144
    %v175 = vsel %vm159, %v158, %v143
    %192 = vrot.lane.b32.xlu0 %v109, 12
    %v193 = vpop.permute.xlu0 %192
    %194 = vrot.lane.b32.xlu0 %v108, 12
    %v195 = vpop.permute.xlu0 %194
    %196 = vrot.lane.b32.xlu0 %v107, 12
    %v197 = vpop.permute.xlu0 %196
    %198 = vrot.lane.b32.xlu0 %v106, 12
    %v199 = vpop.permute.xlu0 %198
    %200 = vrot.lane.b32.xlu0 %v105, 12
    %v201 = vpop.permute.xlu0 %200
    %202 = vrot.lane.b32.xlu0 %v104, 12
    %v203 = vpop.permute.xlu0 %202
    %204 = vrot.lane.b32.xlu0 %v103, 12
    %v205 = vpop.permute.xlu0 %204
    %206 = vrot.lane.b32.xlu0 %v102, 12
    %v207 = vpop.permute.xlu0 %206
    %208 = vrot.lane.b32.xlu0 %v101, 12
    %v209 = vpop.permute.xlu0 %208
    %210 = vrot.lane.b32.xlu0 %v100, 12
    %v211 = vpop.permute.xlu0 %210
    %212 = vrot.lane.b32.xlu0 %v99, 12
    %v213 = vpop.permute.xlu0 %212
    %214 = vrot.lane.b32.xlu0 %v98, 12
    %v215 = vpop.permute.xlu0 %214
    %216 = vrot.lane.b32.xlu0 %v97, 12
    %v217 = vpop.permute.xlu0 %216
    %218 = vrot.lane.b32.xlu0 %v96, 12
    %v219 = vpop.permute.xlu0 %218
    %220 = vrot.lane.b32.xlu0 %v95, 12
    %v221 = vpop.permute.xlu0 %220
    %222 = vrot.lane.b32.xlu0 %v94, 12
    %v223 = vpop.permute.xlu0 %222
    %256 = vrot.lane.b32.xlu0 %v25, 24
    %v257 = vpop.permute.xlu0 %256
    %258 = vrot.lane.b32.xlu0 %v26, 24
    %v259 = vpop.permute.xlu0 %258
    %260 = vrot.lane.b32.xlu0 %v27, 24
    %v261 = vpop.permute.xlu0 %260
    %262 = vrot.lane.b32.xlu0 %v28, 24
    %v263 = vpop.permute.xlu0 %262
    %264 = vrot.lane.b32.xlu0 %v29, 24
    %v265 = vpop.permute.xlu0 %264
    %266 = vrot.lane.b32.xlu0 %v30, 24
    %v267 = vpop.permute.xlu0 %266
    %268 = vrot.lane.b32.xlu0 %v31, 24
    %v269 = vpop.permute.xlu0 %268
    %270 = vrot.lane.b32.xlu0 %v32, 24
    %v271 = vpop.permute.xlu0 %270
    %272 = vrot.lane.b32.xlu0 %v33, 24
    %v273 = vpop.permute.xlu0 %272
    %274 = vrot.lane.b32.xlu0 %v34, 24
    %v275 = vpop.permute.xlu0 %274
    %276 = vrot.lane.b32.xlu0 %v35, 24
    %v277 = vpop.permute.xlu0 %276
    %278 = vrot.lane.b32.xlu0 %v36, 24
    %v279 = vpop.permute.xlu0 %278
    %280 = vrot.lane.b32.xlu0 %v37, 24
    %v281 = vpop.permute.xlu0 %280
    %282 = vrot.lane.b32.xlu0 %v38, 24
    %v283 = vpop.permute.xlu0 %282
    %284 = vrot.lane.b32.xlu0 %v39, 24
    %v285 = vpop.permute.xlu0 %284
    %286 = vrot.lane.b32.xlu0 %v40, 24
    %v287 = vpop.permute.xlu0 %286
    %320 = vrot.lane.b32.xlu0 %v141, 36
    %v321 = vpop.permute.xlu0 %320
    %322 = vrot.lane.b32.xlu0 %v140, 36
    %v323 = vpop.permute.xlu0 %322
    %324 = vrot.lane.b32.xlu0 %v139, 36
    %v325 = vpop.permute.xlu0 %324
    %326 = vrot.lane.b32.xlu0 %v138, 36
    %v327 = vpop.permute.xlu0 %326
    %328 = vrot.lane.b32.xlu0 %v137, 36
    %v329 = vpop.permute.xlu0 %328
    %330 = vrot.lane.b32.xlu0 %v136, 36
    %v331 = vpop.permute.xlu0 %330
    %332 = vrot.lane.b32.xlu0 %v135, 36
    %v333 = vpop.permute.xlu0 %332
    %334 = vrot.lane.b32.xlu0 %v134, 36
    %v335 = vpop.permute.xlu0 %334
    %336 = vrot.lane.b32.xlu0 %v133, 36
    %v337 = vpop.permute.xlu0 %336
    %338 = vrot.lane.b32.xlu0 %v132, 36
    %v339 = vpop.permute.xlu0 %338
    %340 = vrot.lane.b32.xlu0 %v131, 36
    %v341 = vpop.permute.xlu0 %340
    %342 = vrot.lane.b32.xlu0 %v130, 36
    %v343 = vpop.permute.xlu0 %342
    %344 = vrot.lane.b32.xlu0 %v129, 36
    %v345 = vpop.permute.xlu0 %344
    %346 = vrot.lane.b32.xlu0 %v128, 36
    %v347 = vpop.permute.xlu0 %346
    %348 = vrot.lane.b32.xlu0 %v127, 36
    %v349 = vpop.permute.xlu0 %348
    %350 = vrot.lane.b32.xlu0 %v142, 36
    %v351 = vpop.permute.xlu0 %350
    %384 = vrot.lane.b32.xlu0 %v174, 48
    %v385 = vpop.permute.xlu0 %384
    %386 = vrot.lane.b32.xlu0 %v173, 48
    %v387 = vpop.permute.xlu0 %386
    %388 = vrot.lane.b32.xlu0 %v172, 48
    %v389 = vpop.permute.xlu0 %388
    %390 = vrot.lane.b32.xlu0 %v171, 48
    %v391 = vpop.permute.xlu0 %390
    %392 = vrot.lane.b32.xlu0 %v170, 48
    %v393 = vpop.permute.xlu0 %392
    %394 = vrot.lane.b32.xlu0 %v169, 48
    %v395 = vpop.permute.xlu0 %394
    %396 = vrot.lane.b32.xlu0 %v168, 48
    %v397 = vpop.permute.xlu0 %396
    %398 = vrot.lane.b32.xlu0 %v167, 48
    %v399 = vpop.permute.xlu0 %398
    %400 = vrot.lane.b32.xlu0 %v166, 48
    %v401 = vpop.permute.xlu0 %400
    %402 = vrot.lane.b32.xlu0 %v165, 48
    %v403 = vpop.permute.xlu0 %402
    %404 = vrot.lane.b32.xlu0 %v164, 48
    %v405 = vpop.permute.xlu0 %404
    %406 = vrot.lane.b32.xlu0 %v163, 48
    %v407 = vpop.permute.xlu0 %406
    %408 = vrot.lane.b32.xlu0 %v162, 48
    %v409 = vpop.permute.xlu0 %408
    %410 = vrot.lane.b32.xlu0 %v161, 48
    %v411 = vpop.permute.xlu0 %410
    %412 = vrot.lane.b32.xlu0 %v160, 48
    %v413 = vpop.permute.xlu0 %412
    %414 = vrot.lane.b32.xlu0 %v175, 48
    %v415 = vpop.permute.xlu0 %414
    %vm432 = vcmask 97280
    %v433 = vsel %vm432, %v76, %v193
    %v434 = vsel %vm432, %v75, %v195
    %v435 = vsel %vm432, %v74, %v197
    %v436 = vsel %vm432, %v73, %v199
    %v437 = vsel %vm432, %v72, %v201
    %v438 = vsel %vm432, %v71, %v203
    %v439 = vsel %vm432, %v70, %v205
    %v440 = vsel %vm432, %v69, %v207
    %v441 = vsel %vm432, %v68, %v209
    %v442 = vsel %vm432, %v67, %v211
    %v443 = vsel %vm432, %v66, %v213
    %v444 = vsel %vm432, %v65, %v215
    %v445 = vsel %vm432, %v64, %v217
    %v446 = vsel %vm432, %v63, %v219
    %v447 = vsel %vm432, %v62, %v221
    %v448 = vsel %vm432, %v61, %v223
    %vm449 = vcmask 195584
    %v450 = vsel %vm449, %v433, %v257
    %v451 = vsel %vm449, %v434, %v259
    %v452 = vsel %vm449, %v435, %v261
    %v453 = vsel %vm449, %v436, %v263
    %v454 = vsel %vm449, %v437, %v265
    %v455 = vsel %vm449, %v438, %v267
    %v456 = vsel %vm449, %v439, %v269
    %v457 = vsel %vm449, %v440, %v271
    %v458 = vsel %vm449, %v441, %v273
    %v459 = vsel %vm449, %v442, %v275
    %v460 = vsel %vm449, %v443, %v277
    %v461 = vsel %vm449, %v444, %v279
    %v462 = vsel %vm449, %v445, %v281
    %v463 = vsel %vm449, %v446, %v283
    %v464 = vsel %vm449, %v447, %v285
    %v465 = vsel %vm449, %v448, %v287
    %vm466 = vcmask 293888
    %v467 = vsel %vm466, %v450, %v321
    %v468 = vsel %vm466, %v451, %v323
    %v469 = vsel %vm466, %v452, %v325
    %v470 = vsel %vm466, %v453, %v327
    %v471 = vsel %vm466, %v454, %v329
    %v472 = vsel %vm466, %v455, %v331
    %v473 = vsel %vm466, %v456, %v333
    %v474 = vsel %vm466, %v457, %v335
    %v475 = vsel %vm466, %v458, %v337
    %v476 = vsel %vm466, %v459, %v339
    %v477 = vsel %vm466, %v460, %v341
    %v478 = vsel %vm466, %v461, %v343
    %v479 = vsel %vm466, %v462, %v345
    %v480 = vsel %vm466, %v463, %v347
    %v481 = vsel %vm466, %v464, %v349
    %v482 = vsel %vm466, %v465, %v351
    %vm483 = vcmask 392192
    %v484 = vsel %vm483, %v467, %v385
    %v485 = vsel %vm483, %v468, %v387
    %v486 = vsel %vm483, %v469, %v389
    %v487 = vsel %vm483, %v470, %v391
    %v488 = vsel %vm483, %v471, %v393
    %v489 = vsel %vm483, %v472, %v395
    %v490 = vsel %vm483, %v473, %v397
    %v491 = vsel %vm483, %v474, %v399
    %v492 = vsel %vm483, %v475, %v401
    %v493 = vsel %vm483, %v476, %v403
    %v494 = vsel %vm483, %v477, %v405
    %v495 = vsel %vm483, %v478, %v407
    %v496 = vsel %vm483, %v479, %v409
    %v497 = vsel %vm483, %v480, %v411
    %v498 = vsel %vm483, %v481, %v413
    %v499 = vsel %vm483, %v482, %v415
    %v500 = vld [vmem:[#allocation2 + $0x120] sm:$0xff]
    %v501 = vld [vmem:[#allocation2 + $0x128] sm:$0xff]
    %v502 = vld [vmem:[#allocation2 + $0x130] sm:$0xff]
    %v503 = vld [vmem:[#allocation2 + $0x138] sm:$0xff]
    %v504 = vld [vmem:[#allocation2 + $0x140] sm:$0xff]
    %v505 = vld [vmem:[#allocation2 + $0x148] sm:$0xff]
    %v506 = vld [vmem:[#allocation2 + $0x150] sm:$0xff]
    %v507 = vld [vmem:[#allocation2 + $0x158] sm:$0xff]
    %v508 = vld [vmem:[#allocation2 + $0x160] sm:$0xff]
    %v509 = vld [vmem:[#allocation2 + $0x168] sm:$0xff]
    %v510 = vld [vmem:[#allocation2 + $0x170] sm:$0xff]
    %v511 = vld [vmem:[#allocation2 + $0x178] sm:$0xff]
    %v512 = vld [vmem:[#allocation2 + $0x180] sm:$0xff]
    %v513 = vld [vmem:[#allocation2 + $0x188] sm:$0xff]
    %v514 = vld [vmem:[#allocation2 + $0x190] sm:$0xff]
    %v515 = vld [vmem:[#allocation2 + $0x198] sm:$0xff]
    %v516 = vmul.f32 %v484, %v500
    %v517 = vmul.f32 %v485, %v501
    %v518 = vmul.f32 %v486, %v502
    %v519 = vmul.f32 %v487, %v503
    %v520 = vmul.f32 %v488, %v504
    %v521 = vmul.f32 %v489, %v505
    %v522 = vmul.f32 %v490, %v506
    %v523 = vmul.f32 %v491, %v507
    %v524 = vmul.f32 %v492, %v508
    %v525 = vmul.f32 %v493, %v509
    %v526 = vmul.f32 %v494, %v510
    %v527 = vmul.f32 %v495, %v511
    %v528 = vmul.f32 %v496, %v512
    %v529 = vmul.f32 %v497, %v513
    %v530 = vmul.f32 %v498, %v514
    %v531 = vmul.f32 %v499, %v515
    %v532 = vld [vmem:[#allocation2] sm:$0xff]
    %v533 = vld [vmem:[#allocation2 + $0x8] sm:$0xff]
    %v534 = vld [vmem:[#allocation2 + $0x10] sm:$0xff]
    %v535 = vld [vmem:[#allocation2 + $0x18] sm:$0xff]
    %v536 = vld [vmem:[#allocation2 + $0x20] sm:$0xff]
    %v537 = vld [vmem:[#allocation2 + $0x28] sm:$0xff]
    %v538 = vld [vmem:[#allocation2 + $0x30] sm:$0xff]
    %v539 = vld [vmem:[#allocation2 + $0x38] sm:$0xf]
    %v540 = vld [vmem:[#allocation2 + $0x40] sm:$0x1]
    %v541 = vlaneseq
    %v542 = vshrl.u32 %v541, 7
    %v543 = vsub.s32 0, %v542
    %v544 = vrot.slane %v540, %v543
    %vm545 = vcmask 490496
    %v547 = vsel %vm545, %v516, 0
    %v550 = vsel %vm545, %v517, 0
    %v553 = vsel %vm545, %v518, 0
    %v556 = vsel %vm545, %v519, 0
    %v559 = vsel %vm545, %v520, 0
    %v562 = vsel %vm545, %v521, 0
    %v565 = vsel %vm545, %v522, 0
    %v568 = vsel %vm545, %v523, 0
    %v571 = vsel %vm545, %v524, 0
    %v574 = vsel %vm545, %v525, 0
    %v577 = vsel %vm545, %v526, 0
    %v580 = vsel %vm545, %v527, 0
    %v583 = vsel %vm545, %v528, 0
    %v586 = vsel %vm545, %v529, 0
    %v589 = vsel %vm545, %v530, 0
    %v592 = vsel %vm545, %v531, 0
    %vm594 = vcmask 1043456
    %v596 = vsel %vm594, %v539, 0
    %598 = vmatprep.subr.mxu0 0.0
    %599 = vmatpush1.msra.mxu0 0.0
    %600 = vmatprep.subr.mxu0 0.0
    %601 = vmatpush1.msra.mxu0 0.0
    %602 = vmatprep.subr.mxu0 0.0
    %603 = vmatpush1.msra.mxu0 0.0
    %604 = vmatprep.subr.mxu0 0.0
    %605 = vmatpush1.msra.mxu0 0.0
    %606 = vmatprep.subr.mxu0 0.0
    %607 = vmatpush1.msra.mxu0 0.0
    %608 = vmatprep.subr.mxu0 0.0
    %609 = vmatpush1.msra.mxu0 0.0
    %610 = vmatprep.subr.mxu0 0.0
    %611 = vmatpush1.msra.mxu0 0.0
    %612 = vmatprep.subr.mxu0 0.0
    %613 = vmatpush1.msra.mxu0 0.0
    %614 = vmatprep.subr.mxu0 0.0
    %615 = vmatpush1.msra.mxu0 %v596
    %616 = vmatprep.subr.mxu0 0.0
    %617 = vmatpush1.msra.mxu0 %v538
    %618 = vmatprep.subr.mxu0 0.0
    %619 = vmatpush1.msra.mxu0 %v537
    %620 = vmatprep.subr.mxu0 0.0
    %621 = vmatpush1.msra.mxu0 %v536
    %622 = vmatprep.subr.mxu0 0.0
    %623 = vmatpush1.msra.mxu0 %v535
    %624 = vmatprep.subr.mxu0 0.0
    %625 = vmatpush1.msra.mxu0 %v534
    %626 = vmatprep.subr.mxu0 0.0
    %627 = vmatpush1.msra.mxu0 %v533
    %628 = vmatprep.subr.mxu0 0.0
    %629 = vmatpush1.msra.mxu0 %v532
    %630 = vmatprep.subr.mxu0 0.0
    %631 = vmatpush2.msra.mxu0 0.0
    %632 = vmatprep.subr.mxu0 0.0
    %633 = vmatpush2.msra.mxu0 0.0
    %634 = vmatprep.subr.mxu0 0.0
    %635 = vmatpush2.msra.mxu0 0.0
    %636 = vmatprep.subr.mxu0 0.0
    %637 = vmatpush2.msra.mxu0 0.0
    %638 = vmatprep.subr.mxu0 0.0
    %639 = vmatpush2.msra.mxu0 0.0
    %640 = vmatprep.subr.mxu0 0.0
    %641 = vmatpush2.msra.mxu0 0.0
    %642 = vmatprep.subr.mxu0 0.0
    %643 = vmatpush2.msra.mxu0 0.0
    %644 = vmatprep.subr.mxu0 0.0
    %645 = vmatpush2.msra.mxu0 0.0
    %646 = vmatprep.subr.mxu0 0.0
    %647 = vmatpush2.msra.mxu0 0.0
    %648 = vmatprep.subr.mxu0 0.0
    %649 = vmatpush2.msra.mxu0 0.0
    %650 = vmatprep.subr.mxu0 0.0
    %651 = vmatpush2.msra.mxu0 0.0
    %652 = vmatprep.subr.mxu0 0.0
    %653 = vmatpush2.msra.mxu0 0.0
    %654 = vmatprep.subr.mxu0 0.0
    %655 = vmatpush2.msra.mxu0 0.0
    %656 = vmatprep.subr.mxu0 0.0
    %657 = vmatpush2.msra.mxu0 0.0
    %658 = vmatprep.subr.mxu0 0.0
    %659 = vmatpush2.msra.mxu0 0.0
    %660 = vmatprep.subr.mxu0 0.0
    %661 = vmatpush2.msra.mxu0 0.0
    %662 = vmatprep.mubr.f32.mxu0 0.0
    %663 = vmatmul.mubr.f32.gmra.mxu0 %v547
    %v664 = vpop.f32.mrf.mxu0
    %v665 = vadd.f32 %v544, %v664
    %v666 = vpop.f32.mrf.mxu0
    %667 = vmatprep.mubr.f32.mxu0 0.0
    %668 = vmatmul.mubr.f32.gmra.mxu0 %v550
    %v669 = vpop.f32.mrf.mxu0
    %v670 = vadd.f32 %v544, %v669
    %v671 = vpop.f32.mrf.mxu0
    %672 = vmatprep.mubr.f32.mxu0 0.0
    %673 = vmatmul.mubr.f32.gmra.mxu0 %v553
    %v674 = vpop.f32.mrf.mxu0
    %v675 = vadd.f32 %v544, %v674
    %v676 = vpop.f32.mrf.mxu0
    %677 = vmatprep.mubr.f32.mxu0 0.0
    %678 = vmatmul.mubr.f32.gmra.mxu0 %v556
    %v679 = vpop.f32.mrf.mxu0
    %v680 = vadd.f32 %v544, %v679
    %v681 = vpop.f32.mrf.mxu0
    %682 = vmatprep.mubr.f32.mxu0 0.0
    %683 = vmatmul.mubr.f32.gmra.mxu0 %v559
    %v684 = vpop.f32.mrf.mxu0
    %v685 = vadd.f32 %v544, %v684
    %v686 = vpop.f32.mrf.mxu0
    %687 = vmatprep.mubr.f32.mxu0 0.0
    %688 = vmatmul.mubr.f32.gmra.mxu0 %v562
    %v689 = vpop.f32.mrf.mxu0
    %v690 = vadd.f32 %v544, %v689
    %v691 = vpop.f32.mrf.mxu0
    %692 = vmatprep.mubr.f32.mxu0 0.0
    %693 = vmatmul.mubr.f32.gmra.mxu0 %v565
    %v694 = vpop.f32.mrf.mxu0
    %v695 = vadd.f32 %v544, %v694
    %v696 = vpop.f32.mrf.mxu0
    %697 = vmatprep.mubr.f32.mxu0 0.0
    %698 = vmatmul.mubr.f32.gmra.mxu0 %v568
    %v699 = vpop.f32.mrf.mxu0
    %v700 = vadd.f32 %v544, %v699
    %v701 = vpop.f32.mrf.mxu0
    %702 = vmatprep.mubr.f32.mxu0 0.0
    %703 = vmatmul.mubr.f32.gmra.mxu0 %v571
    %v704 = vpop.f32.mrf.mxu0
    %v705 = vadd.f32 %v544, %v704
    %v706 = vpop.f32.mrf.mxu0
    %707 = vmatprep.mubr.f32.mxu0 0.0
    %708 = vmatmul.mubr.f32.gmra.mxu0 %v574
    %v709 = vpop.f32.mrf.mxu0
    %v710 = vadd.f32 %v544, %v709
    %v711 = vpop.f32.mrf.mxu0
    %712 = vmatprep.mubr.f32.mxu0 0.0
    %713 = vmatmul.mubr.f32.gmra.mxu0 %v577
    %v714 = vpop.f32.mrf.mxu0
    %v715 = vadd.f32 %v544, %v714
    %v716 = vpop.f32.mrf.mxu0
    %717 = vmatprep.mubr.f32.mxu0 0.0
    %718 = vmatmul.mubr.f32.gmra.mxu0 %v580
    %v719 = vpop.f32.mrf.mxu0
    %v720 = vadd.f32 %v544, %v719
    %v721 = vpop.f32.mrf.mxu0
    %722 = vmatprep.mubr.f32.mxu0 0.0
    %723 = vmatmul.mubr.f32.gmra.mxu0 %v583
    %v724 = vpop.f32.mrf.mxu0
    %v725 = vadd.f32 %v544, %v724
    %v726 = vpop.f32.mrf.mxu0
    %727 = vmatprep.mubr.f32.mxu0 0.0
    %728 = vmatmul.mubr.f32.gmra.mxu0 %v586
    %v729 = vpop.f32.mrf.mxu0
    %v730 = vadd.f32 %v544, %v729
    %v731 = vpop.f32.mrf.mxu0
    %732 = vmatprep.mubr.f32.mxu0 0.0
    %733 = vmatmul.mubr.f32.gmra.mxu0 %v589
    %v734 = vpop.f32.mrf.mxu0
    %v735 = vadd.f32 %v544, %v734
    %v736 = vpop.f32.mrf.mxu0
    %737 = vmatprep.mubr.f32.mxu0 0.0
    %738 = vmatmul.mubr.f32.gmra.mxu0 %v592
    %v739 = vpop.f32.mrf.mxu0
    %v740 = vadd.f32 %v544, %v739
    %v741 = vpop.f32.mrf.mxu0
    %742 = vdwg.mxu0
    %v743 = vmax.f32 %v665, 0.0
    %v744 = vmax.f32 %v670, 0.0
    %v745 = vmax.f32 %v675, 0.0
    %v746 = vmax.f32 %v680, 0.0
    %v747 = vmax.f32 %v685, 0.0
    %v748 = vmax.f32 %v690, 0.0
    %v749 = vmax.f32 %v695, 0.0
    %v750 = vmax.f32 %v700, 0.0
    %v751 = vmax.f32 %v705, 0.0
    %v752 = vmax.f32 %v710, 0.0
    %v753 = vmax.f32 %v715, 0.0
    %v754 = vmax.f32 %v720, 0.0
    %v755 = vmax.f32 %v725, 0.0
    %v756 = vmax.f32 %v730, 0.0
    %v757 = vmax.f32 %v735, 0.0
    %v758 = vmax.f32 %v740, 0.0
    %v759 = vld [vmem:[#allocation2 + $0x48] sm:$0x3]
    %760 = vmatprep.subr.mxu0 0.0
    %761 = vmatpush1.msra.mxu0 %v758
    %762 = vmatprep.subr.mxu0 0.0
    %763 = vmatpush1.msra.mxu0 %v757
    %764 = vmatprep.subr.mxu0 0.0
    %765 = vmatpush1.msra.mxu0 %v756
    %766 = vmatprep.subr.mxu0 0.0
    %767 = vmatpush1.msra.mxu0 %v755
    %768 = vmatprep.subr.mxu0 0.0
    %769 = vmatpush1.msra.mxu0 %v754
    %770 = vmatprep.subr.mxu0 0.0
    %771 = vmatpush1.msra.mxu0 %v753
    %772 = vmatprep.subr.mxu0 0.0
    %773 = vmatpush1.msra.mxu0 %v752
    %774 = vmatprep.subr.mxu0 0.0
    %775 = vmatpush1.msra.mxu0 %v751
    %776 = vmatprep.subr.mxu0 0.0
    %777 = vmatpush1.msra.mxu0 %v750
    %778 = vmatprep.subr.mxu0 0.0
    %779 = vmatpush1.msra.mxu0 %v749
    %780 = vmatprep.subr.mxu0 0.0
    %781 = vmatpush1.msra.mxu0 %v748
    %782 = vmatprep.subr.mxu0 0.0
    %783 = vmatpush1.msra.mxu0 %v747
    %784 = vmatprep.subr.mxu0 0.0
    %785 = vmatpush1.msra.mxu0 %v746
    %786 = vmatprep.subr.mxu0 0.0
    %787 = vmatpush1.msra.mxu0 %v745
    %788 = vmatprep.subr.mxu0 0.0
    %789 = vmatpush1.msra.mxu0 %v744
    %790 = vmatprep.subr.mxu0 0.0
    %791 = vmatpush1.msra.mxu0 %v743
    %792 = vmatprep.subr.mxu0 0.0
    %793 = vmatpush2.msra.mxu0 0.0
    %794 = vmatprep.subr.mxu0 0.0
    %795 = vmatpush2.msra.mxu0 0.0
    %796 = vmatprep.subr.mxu0 0.0
    %797 = vmatpush2.msra.mxu0 0.0
    %798 = vmatprep.subr.mxu0 0.0
    %799 = vmatpush2.msra.mxu0 0.0
    %800 = vmatprep.subr.mxu0 0.0
    %801 = vmatpush2.msra.mxu0 0.0
    %802 = vmatprep.subr.mxu0 0.0
    %803 = vmatpush2.msra.mxu0 0.0
    %804 = vmatprep.subr.mxu0 0.0
    %805 = vmatpush2.msra.mxu0 0.0
    %806 = vmatprep.subr.mxu0 0.0
    %807 = vmatpush2.msra.mxu0 0.0
    %808 = vmatprep.subr.mxu0 0.0
    %809 = vmatpush2.msra.mxu0 0.0
    %810 = vmatprep.subr.mxu0 0.0
    %811 = vmatpush2.msra.mxu0 0.0
    %812 = vmatprep.subr.mxu0 0.0
    %813 = vmatpush2.msra.mxu0 0.0
    %814 = vmatprep.subr.mxu0 0.0
    %815 = vmatpush2.msra.mxu0 0.0
    %816 = vmatprep.subr.mxu0 0.0
    %817 = vmatpush2.msra.mxu0 0.0
    %818 = vmatprep.subr.mxu0 0.0
    %819 = vmatpush2.msra.mxu0 0.0
    %820 = vmatprep.subr.mxu0 0.0
    %821 = vmatpush2.msra.mxu0 0.0
    %822 = vmatprep.subr.mxu0 0.0
    %823 = vmatpush2.msra.mxu0 0.0
    %824 = vmatprep.mubr.f32.mxu0 0.0
    %825 = vmatmul.mubr.f32.gmra.mxu0 %v759
    %v826 = vpop.f32.mrf.mxu0
    %v827 = vadd.f32 0.0, %v826
    %v828 = vpop.f32.mrf.mxu0
    %829 = vdwg.mxu0
    %v830 = vld [vmem:[#allocation2 + $0x50] sm:$0xff]
    %v831 = vld [vmem:[#allocation2 + $0x58] sm:$0xff]
    %v832 = vld [vmem:[#allocation2 + $0x60] sm:$0xff]
    %v833 = vld [vmem:[#allocation2 + $0x68] sm:$0xff]
    %v834 = vld [vmem:[#allocation2 + $0x70] sm:$0xff]
    %v835 = vld [vmem:[#allocation2 + $0x78] sm:$0xff]
    %v836 = vld [vmem:[#allocation2 + $0x80] sm:$0xff]
    %v837 = vld [vmem:[#allocation2 + $0x88] sm:$0xff]
    %v838 = vld [vmem:[#allocation2 + $0x90] sm:$0xff]
    %v839 = vld [vmem:[#allocation2 + $0x98] sm:$0x1]
    %v840 = vlaneseq
    %v841 = vshrl.u32 %v840, 7
    %v842 = vsub.s32 0, %v841
    %v843 = vrot.slane %v839, %v842
    %vm844 = vcmask 588800
    %v846 = vsel %vm844, %v827, 0
    %848 = vmatprep.subr.mxu0 0.0
    %849 = vmatpush1.msra.mxu0 0.0
    %850 = vmatprep.subr.mxu0 0.0
    %851 = vmatpush1.msra.mxu0 0.0
    %852 = vmatprep.subr.mxu0 0.0
    %853 = vmatpush1.msra.mxu0 0.0
    %854 = vmatprep.subr.mxu0 0.0
    %855 = vmatpush1.msra.mxu0 0.0
    %856 = vmatprep.subr.mxu0 0.0
    %857 = vmatpush1.msra.mxu0 0.0
    %858 = vmatprep.subr.mxu0 0.0
    %859 = vmatpush1.msra.mxu0 0.0
    %860 = vmatprep.subr.mxu0 0.0
    %861 = vmatpush1.msra.mxu0 0.0
    %862 = vmatprep.subr.mxu0 0.0
    %863 = vmatpush1.msra.mxu0 %v838
    %864 = vmatprep.subr.mxu0 0.0
    %865 = vmatpush1.msra.mxu0 %v837
    %866 = vmatprep.subr.mxu0 0.0
    %867 = vmatpush1.msra.mxu0 %v836
    %868 = vmatprep.subr.mxu0 0.0
    %869 = vmatpush1.msra.mxu0 %v835
    %870 = vmatprep.subr.mxu0 0.0
    %871 = vmatpush1.msra.mxu0 %v834
    %872 = vmatprep.subr.mxu0 0.0
    %873 = vmatpush1.msra.mxu0 %v833
    %874 = vmatprep.subr.mxu0 0.0
    %875 = vmatpush1.msra.mxu0 %v832
    %876 = vmatprep.subr.mxu0 0.0
    %877 = vmatpush1.msra.mxu0 %v831
    %878 = vmatprep.subr.mxu0 0.0
    %879 = vmatpush1.msra.mxu0 %v830
    %880 = vmatprep.subr.mxu0 0.0
    %881 = vmatpush2.msra.mxu0 0.0
    %882 = vmatprep.subr.mxu0 0.0
    %883 = vmatpush2.msra.mxu0 0.0
    %884 = vmatprep.subr.mxu0 0.0
    %885 = vmatpush2.msra.mxu0 0.0
    %886 = vmatprep.subr.mxu0 0.0
    %887 = vmatpush2.msra.mxu0 0.0
    %888 = vmatprep.subr.mxu0 0.0
    %889 = vmatpush2.msra.mxu0 0.0
    %890 = vmatprep.subr.mxu0 0.0
    %891 = vmatpush2.msra.mxu0 0.0
    %892 = vmatprep.subr.mxu0 0.0
    %893 = vmatpush2.msra.mxu0 0.0
    %894 = vmatprep.subr.mxu0 0.0
    %895 = vmatpush2.msra.mxu0 0.0
    %896 = vmatprep.subr.mxu0 0.0
    %897 = vmatpush2.msra.mxu0 0.0
    %898 = vmatprep.subr.mxu0 0.0
    %899 = vmatpush2.msra.mxu0 0.0
    %900 = vmatprep.subr.mxu0 0.0
    %901 = vmatpush2.msra.mxu0 0.0
    %902 = vmatprep.subr.mxu0 0.0
    %903 = vmatpush2.msra.mxu0 0.0
    %904 = vmatprep.subr.mxu0 0.0
    %905 = vmatpush2.msra.mxu0 0.0
    %906 = vmatprep.subr.mxu0 0.0
    %907 = vmatpush2.msra.mxu0 0.0
    %908 = vmatprep.subr.mxu0 0.0
    %909 = vmatpush2.msra.mxu0 0.0
    %910 = vmatprep.subr.mxu0 0.0
    %911 = vmatpush2.msra.mxu0 0.0
    %912 = vmatprep.mubr.f32.mxu0 0.0
    %913 = vmatmul.mubr.f32.gmra.mxu0 %v846
    %v914 = vpop.f32.mrf.mxu0
    %v915 = vadd.f32 %v843, %v914
    %v916 = vpop.f32.mrf.mxu0
    %917 = vdwg.mxu0
    %934 = vrot.lane.b32.xlu0 %v665, 64
    %v935 = vpop.permute.xlu0 %934
    %936 = vrot.lane.b32.xlu0 %v670, 64
    %v937 = vpop.permute.xlu0 %936
    %938 = vrot.lane.b32.xlu0 %v675, 64
    %v939 = vpop.permute.xlu0 %938
    %940 = vrot.lane.b32.xlu0 %v680, 64
    %v941 = vpop.permute.xlu0 %940
    %942 = vrot.lane.b32.xlu0 %v685, 64
    %v943 = vpop.permute.xlu0 %942
    %944 = vrot.lane.b32.xlu0 %v690, 64
    %v945 = vpop.permute.xlu0 %944
    %946 = vrot.lane.b32.xlu0 %v695, 64
    %v947 = vpop.permute.xlu0 %946
    %948 = vrot.lane.b32.xlu0 %v700, 64
    %v949 = vpop.permute.xlu0 %948
    %950 = vrot.lane.b32.xlu0 %v705, 64
    %v951 = vpop.permute.xlu0 %950
    %952 = vrot.lane.b32.xlu0 %v710, 64
    %v953 = vpop.permute.xlu0 %952
    %954 = vrot.lane.b32.xlu0 %v715, 64
    %v955 = vpop.permute.xlu0 %954
    %956 = vrot.lane.b32.xlu0 %v720, 64
    %v957 = vpop.permute.xlu0 %956
    %958 = vrot.lane.b32.xlu0 %v725, 64
    %v959 = vpop.permute.xlu0 %958
    %960 = vrot.lane.b32.xlu0 %v730, 64
    %v961 = vpop.permute.xlu0 %960
    %962 = vrot.lane.b32.xlu0 %v735, 64
    %v963 = vpop.permute.xlu0 %962
    %964 = vrot.lane.b32.xlu0 %v740, 64
    %v965 = vpop.permute.xlu0 %964
    %v982 = vrot.slane %v935, 1
    %v983 = vrot.slane %v937, 1
    %v984 = vrot.slane %v939, 1
    %v985 = vrot.slane %v941, 1
    %v986 = vrot.slane %v943, 1
    %v987 = vrot.slane %v945, 1
    %v988 = vrot.slane %v947, 1
    %v989 = vrot.slane %v949, 1
    %v990 = vrot.slane %v951, 1
    %v991 = vrot.slane %v953, 1
    %v992 = vrot.slane %v955, 1
    %v993 = vrot.slane %v957, 1
    %v994 = vrot.slane %v959, 1
    %v995 = vrot.slane %v961, 1
    %v996 = vrot.slane %v963, 1
    %v997 = vrot.slane %v965, 1
    %v998 = vsel %vm126, %v996, %v997
    %v999 = vsel %vm126, %v995, %v996
    %v1000 = vsel %vm126, %v994, %v995
    %v1001 = vsel %vm126, %v993, %v994
    %v1002 = vsel %vm126, %v992, %v993
    %v1003 = vsel %vm126, %v991, %v992
    %v1004 = vsel %vm126, %v990, %v991
    %v1005 = vsel %vm126, %v989, %v990
    %v1006 = vsel %vm126, %v988, %v989
    %v1007 = vsel %vm126, %v987, %v988
    %v1008 = vsel %vm126, %v986, %v987
    %v1009 = vsel %vm126, %v985, %v986
    %v1010 = vsel %vm126, %v984, %v985
    %v1011 = vsel %vm126, %v983, %v984
    %v1012 = vsel %vm126, %v982, %v983
    %v1013 = vsel %vm126, %v997, %v982
    %1030 = vrot.lane.b32.xlu0 %v1012, 64
    %v1031 = vpop.permute.xlu0 %1030
    %1032 = vrot.lane.b32.xlu0 %v1011, 64
    %v1033 = vpop.permute.xlu0 %1032
    %1034 = vrot.lane.b32.xlu0 %v1010, 64
    %v1035 = vpop.permute.xlu0 %1034
    %1036 = vrot.lane.b32.xlu0 %v1009, 64
    %v1037 = vpop.permute.xlu0 %1036
    %1038 = vrot.lane.b32.xlu0 %v1008, 64
    %v1039 = vpop.permute.xlu0 %1038
    %1040 = vrot.lane.b32.xlu0 %v1007, 64
    %v1041 = vpop.permute.xlu0 %1040
    %1042 = vrot.lane.b32.xlu0 %v1006, 64
    %v1043 = vpop.permute.xlu0 %1042
    %1044 = vrot.lane.b32.xlu0 %v1005, 64
    %v1045 = vpop.permute.xlu0 %1044
    %1046 = vrot.lane.b32.xlu0 %v1004, 64
    %v1047 = vpop.permute.xlu0 %1046
    %1048 = vrot.lane.b32.xlu0 %v1003, 64
    %v1049 = vpop.permute.xlu0 %1048
    %1050 = vrot.lane.b32.xlu0 %v1002, 64
    %v1051 = vpop.permute.xlu0 %1050
    %1052 = vrot.lane.b32.xlu0 %v1001, 64
    %v1053 = vpop.permute.xlu0 %1052
    %1054 = vrot.lane.b32.xlu0 %v1000, 64
    %v1055 = vpop.permute.xlu0 %1054
    %1056 = vrot.lane.b32.xlu0 %v999, 64
    %v1057 = vpop.permute.xlu0 %1056
    %1058 = vrot.lane.b32.xlu0 %v998, 64
    %v1059 = vpop.permute.xlu0 %1058
    %1060 = vrot.lane.b32.xlu0 %v1013, 64
    %v1061 = vpop.permute.xlu0 %1060
    %v1078 = vmax.f32 %v665, %v1031
    %v1079 = vmax.f32 %v670, %v1033
    %v1080 = vmax.f32 %v675, %v1035
    %v1081 = vmax.f32 %v680, %v1037
    %v1082 = vmax.f32 %v685, %v1039
    %v1083 = vmax.f32 %v690, %v1041
    %v1084 = vmax.f32 %v695, %v1043
    %v1085 = vmax.f32 %v700, %v1045
    %v1086 = vmax.f32 %v705, %v1047
    %v1087 = vmax.f32 %v710, %v1049
    %v1088 = vmax.f32 %v715, %v1051
    %v1089 = vmax.f32 %v720, %v1053
    %v1090 = vmax.f32 %v725, %v1055
    %v1091 = vmax.f32 %v730, %v1057
    %v1092 = vmax.f32 %v735, %v1059
    %v1093 = vmax.f32 %v740, %v1061
    %v1094 = vrot.slane %v935, 2
    %v1095 = vrot.slane %v937, 2
    %v1096 = vrot.slane %v939, 2
    %v1097 = vrot.slane %v941, 2
    %v1098 = vrot.slane %v943, 2
    %v1099 = vrot.slane %v945, 2
    %v1100 = vrot.slane %v947, 2
    %v1101 = vrot.slane %v949, 2
    %v1102 = vrot.slane %v951, 2
    %v1103 = vrot.slane %v953, 2
    %v1104 = vrot.slane %v955, 2
    %v1105 = vrot.slane %v957, 2
    %v1106 = vrot.slane %v959, 2
    %v1107 = vrot.slane %v961, 2
    %v1108 = vrot.slane %v963, 2
    %v1109 = vrot.slane %v965, 2
    %v1110 = vsel %vm159, %v1108, %v1109
    %v1111 = vsel %vm159, %v1107, %v1108
    %v1112 = vsel %vm159, %v1106, %v1107
    %v1113 = vsel %vm159, %v1105, %v1106
    %v1114 = vsel %vm159, %v1104, %v1105
    %v1115 = vsel %vm159, %v1103, %v1104
    %v1116 = vsel %vm159, %v1102, %v1103
    %v1117 = vsel %vm159, %v1101, %v1102
    %v1118 = vsel %vm159, %v1100, %v1101
    %v1119 = vsel %vm159, %v1099, %v1100
    %v1120 = vsel %vm159, %v1098, %v1099
    %v1121 = vsel %vm159, %v1097, %v1098
    %v1122 = vsel %vm159, %v1096, %v1097
    %v1123 = vsel %vm159, %v1095, %v1096
    %v1124 = vsel %vm159, %v1094, %v1095
    %v1125 = vsel %vm159, %v1109, %v1094
    %v1126 = vrot.slane %v935, 3
    %v1127 = vrot.slane %v937, 3
    %v1128 = vrot.slane %v939, 3
    %v1129 = vrot.slane %v941, 3
    %v1130 = vrot.slane %v943, 3
    %v1131 = vrot.slane %v945, 3
    %v1132 = vrot.slane %v947, 3
    %v1133 = vrot.slane %v949, 3
    %v1134 = vrot.slane %v951, 3
    %v1135 = vrot.slane %v953, 3
    %v1136 = vrot.slane %v955, 3
    %v1137 = vrot.slane %v957, 3
    %v1138 = vrot.slane %v959, 3
    %v1139 = vrot.slane %v961, 3
    %v1140 = vrot.slane %v963, 3
    %v1141 = vrot.slane %v965, 3
    %vm1142 = vcmp.lt.s32.totalorder %v59, 5
    %v1143 = vsel %vm1142, %v1140, %v1141
    %v1144 = vsel %vm1142, %v1139, %v1140
    %v1145 = vsel %vm1142, %v1138, %v1139
    %v1146 = vsel %vm1142, %v1137, %v1138
    %v1147 = vsel %vm1142, %v1136, %v1137
    %v1148 = vsel %vm1142, %v1135, %v1136
    %v1149 = vsel %vm1142, %v1134, %v1135
    %v1150 = vsel %vm1142, %v1133, %v1134
    %v1151 = vsel %vm1142, %v1132, %v1133
    %v1152 = vsel %vm1142, %v1131, %v1132
    %v1153 = vsel %vm1142, %v1130, %v1131
    %v1154 = vsel %vm1142, %v1129, %v1130
    %v1155 = vsel %vm1142, %v1128, %v1129
    %v1156 = vsel %vm1142, %v1127, %v1128
    %v1157 = vsel %vm1142, %v1126, %v1127
    %v1158 = vsel %vm1142, %v1141, %v1126
    %v1159 = vmax.f32 %v1124, %v1157
    %v1160 = vmax.f32 %v1123, %v1156
    %v1161 = vmax.f32 %v1122, %v1155
    %v1162 = vmax.f32 %v1121, %v1154
    %v1163 = vmax.f32 %v1120, %v1153
    %v1164 = vmax.f32 %v1119, %v1152
    %v1165 = vmax.f32 %v1118, %v1151
    %v1166 = vmax.f32 %v1117, %v1150
    %v1167 = vmax.f32 %v1116, %v1149
    %v1168 = vmax.f32 %v1115, %v1148
    %v1169 = vmax.f32 %v1114, %v1147
    %v1170 = vmax.f32 %v1113, %v1146
    %v1171 = vmax.f32 %v1112, %v1145
    %v1172 = vmax.f32 %v1111, %v1144
    %v1173 = vmax.f32 %v1110, %v1143
    %v1174 = vmax.f32 %v1125, %v1158
    %1191 = vrot.lane.b32.xlu0 %v1159, 64
    %v1192 = vpop.permute.xlu0 %1191
    %1193 = vrot.lane.b32.xlu0 %v1160, 64
    %v1194 = vpop.permute.xlu0 %1193
    %1195 = vrot.lane.b32.xlu0 %v1161, 64
    %v1196 = vpop.permute.xlu0 %1195
    %1197 = vrot.lane.b32.xlu0 %v1162, 64
    %v1198 = vpop.permute.xlu0 %1197
    %1199 = vrot.lane.b32.xlu0 %v1163, 64
    %v1200 = vpop.permute.xlu0 %1199
    %1201 = vrot.lane.b32.xlu0 %v1164, 64
    %v1202 = vpop.permute.xlu0 %1201
    %1203 = vrot.lane.b32.xlu0 %v1165, 64
    %v1204 = vpop.permute.xlu0 %1203
    %1205 = vrot.lane.b32.xlu0 %v1166, 64
    %v1206 = vpop.permute.xlu0 %1205
    %1207 = vrot.lane.b32.xlu0 %v1167, 64
    %v1208 = vpop.permute.xlu0 %1207
    %1209 = vrot.lane.b32.xlu0 %v1168, 64
    %v1210 = vpop.permute.xlu0 %1209
    %1211 = vrot.lane.b32.xlu0 %v1169, 64
    %v1212 = vpop.permute.xlu0 %1211
    %1213 = vrot.lane.b32.xlu0 %v1170, 64
    %v1214 = vpop.permute.xlu0 %1213
    %1215 = vrot.lane.b32.xlu0 %v1171, 64
    %v1216 = vpop.permute.xlu0 %1215
    %1217 = vrot.lane.b32.xlu0 %v1172, 64
    %v1218 = vpop.permute.xlu0 %1217
    %1219 = vrot.lane.b32.xlu0 %v1173, 64
    %v1220 = vpop.permute.xlu0 %1219
    %1221 = vrot.lane.b32.xlu0 %v1174, 64
    %v1222 = vpop.permute.xlu0 %1221
    %v1239 = vmax.f32 %v1078, %v1192
    %v1240 = vmax.f32 %v1079, %v1194
    %v1241 = vmax.f32 %v1080, %v1196
    %v1242 = vmax.f32 %v1081, %v1198
    %v1243 = vmax.f32 %v1082, %v1200
    %v1244 = vmax.f32 %v1083, %v1202
    %v1245 = vmax.f32 %v1084, %v1204
    %v1246 = vmax.f32 %v1085, %v1206
    %v1247 = vmax.f32 %v1086, %v1208
    %v1248 = vmax.f32 %v1087, %v1210
    %v1249 = vmax.f32 %v1088, %v1212
    %v1250 = vmax.f32 %v1089, %v1214
    %v1251 = vmax.f32 %v1090, %v1216
    %v1252 = vmax.f32 %v1091, %v1218
    %v1253 = vmax.f32 %v1092, %v1220
    %v1254 = vmax.f32 %v1093, %v1222
    %v1255 = vld [vmem:[#allocation2 + $0xa0] sm:$0xff]
    %v1256 = vld [vmem:[#allocation2 + $0xa8] sm:$0xff]
    %v1257 = vld [vmem:[#allocation2 + $0xb0] sm:$0xff]
    %v1258 = vld [vmem:[#allocation2 + $0xb8] sm:$0xff]
    %1275 = vrot.lane.b32.xlu0 %v1239, 64
    %v1276 = vpop.permute.xlu0 %1275
    %1277 = vrot.lane.b32.xlu0 %v1240, 64
    %v1278 = vpop.permute.xlu0 %1277
    %1279 = vrot.lane.b32.xlu0 %v1241, 64
    %v1280 = vpop.permute.xlu0 %1279
    %1281 = vrot.lane.b32.xlu0 %v1242, 64
    %v1282 = vpop.permute.xlu0 %1281
    %1283 = vrot.lane.b32.xlu0 %v1243, 64
    %v1284 = vpop.permute.xlu0 %1283
    %1285 = vrot.lane.b32.xlu0 %v1244, 64
    %v1286 = vpop.permute.xlu0 %1285
    %1287 = vrot.lane.b32.xlu0 %v1245, 64
    %v1288 = vpop.permute.xlu0 %1287
    %1289 = vrot.lane.b32.xlu0 %v1246, 64
    %v1290 = vpop.permute.xlu0 %1289
    %1291 = vrot.lane.b32.xlu0 %v1247, 64
    %v1292 = vpop.permute.xlu0 %1291
    %1293 = vrot.lane.b32.xlu0 %v1248, 64
    %v1294 = vpop.permute.xlu0 %1293
    %1295 = vrot.lane.b32.xlu0 %v1249, 64
    %v1296 = vpop.permute.xlu0 %1295
    %1297 = vrot.lane.b32.xlu0 %v1250, 64
    %v1298 = vpop.permute.xlu0 %1297
    %1299 = vrot.lane.b32.xlu0 %v1251, 64
    %v1300 = vpop.permute.xlu0 %1299
    %1301 = vrot.lane.b32.xlu0 %v1252, 64
    %v1302 = vpop.permute.xlu0 %1301
    %1303 = vrot.lane.b32.xlu0 %v1253, 64
    %v1304 = vpop.permute.xlu0 %1303
    %1305 = vrot.lane.b32.xlu0 %v1254, 64
    %v1306 = vpop.permute.xlu0 %1305
    %1323 = vmatprep.subr.mxu0 0.0
    %1324 = vmatpush1.msra.mxu0 %v1306
    %1325 = vmatprep.subr.mxu0 0.0
    %1326 = vmatpush1.msra.mxu0 %v1304
    %1327 = vmatprep.subr.mxu0 0.0
    %1328 = vmatpush1.msra.mxu0 %v1302
    %1329 = vmatprep.subr.mxu0 0.0
    %1330 = vmatpush1.msra.mxu0 %v1300
    %1331 = vmatprep.subr.mxu0 0.0
    %1332 = vmatpush1.msra.mxu0 %v1298
    %1333 = vmatprep.subr.mxu0 0.0
    %1334 = vmatpush1.msra.mxu0 %v1296
    %1335 = vmatprep.subr.mxu0 0.0
    %1336 = vmatpush1.msra.mxu0 %v1294
    %1337 = vmatprep.subr.mxu0 0.0
    %1338 = vmatpush1.msra.mxu0 %v1292
    %1339 = vmatprep.subr.mxu0 0.0
    %1340 = vmatpush1.msra.mxu0 %v1290
    %1341 = vmatprep.subr.mxu0 0.0
    %1342 = vmatpush1.msra.mxu0 %v1288
    %1343 = vmatprep.subr.mxu0 0.0
    %1344 = vmatpush1.msra.mxu0 %v1286
    %1345 = vmatprep.subr.mxu0 0.0
    %1346 = vmatpush1.msra.mxu0 %v1284
    %1347 = vmatprep.subr.mxu0 0.0
    %1348 = vmatpush1.msra.mxu0 %v1282
    %1349 = vmatprep.subr.mxu0 0.0
    %1350 = vmatpush1.msra.mxu0 %v1280
    %1351 = vmatprep.subr.mxu0 0.0
    %1352 = vmatpush1.msra.mxu0 %v1278
    %1353 = vmatprep.subr.mxu0 0.0
    %1354 = vmatpush1.msra.mxu0 %v1276
    %1355 = vmatprep.subr.mxu0 0.0
    %1356 = vmatpush2.msra.mxu0 0.0
    %1357 = vmatprep.subr.mxu0 0.0
    %1358 = vmatpush2.msra.mxu0 0.0
    %1359 = vmatprep.subr.mxu0 0.0
    %1360 = vmatpush2.msra.mxu0 0.0
    %1361 = vmatprep.subr.mxu0 0.0
    %1362 = vmatpush2.msra.mxu0 0.0
    %1363 = vmatprep.subr.mxu0 0.0
    %1364 = vmatpush2.msra.mxu0 0.0
    %1365 = vmatprep.subr.mxu0 0.0
    %1366 = vmatpush2.msra.mxu0 0.0
    %1367 = vmatprep.subr.mxu0 0.0
    %1368 = vmatpush2.msra.mxu0 0.0
    %1369 = vmatprep.subr.mxu0 0.0
    %1370 = vmatpush2.msra.mxu0 0.0
    %1371 = vmatprep.subr.mxu0 0.0
    %1372 = vmatpush2.msra.mxu0 0.0
    %1373 = vmatprep.subr.mxu0 0.0
    %1374 = vmatpush2.msra.mxu0 0.0
    %1375 = vmatprep.subr.mxu0 0.0
    %1376 = vmatpush2.msra.mxu0 0.0
    %1377 = vmatprep.subr.mxu0 0.0
    %1378 = vmatpush2.msra.mxu0 0.0
    %1379 = vmatprep.subr.mxu0 0.0
    %1380 = vmatpush2.msra.mxu0 0.0
    %1381 = vmatprep.subr.mxu0 0.0
    %1382 = vmatpush2.msra.mxu0 0.0
    %1383 = vmatprep.subr.mxu0 0.0
    %1384 = vmatpush2.msra.mxu0 0.0
    %1385 = vmatprep.subr.mxu0 0.0
    %1386 = vmatpush2.msra.mxu0 0.0
    %1387 = vmatprep.mubr.f32.mxu0 0.0
    %1388 = vmatmul.mubr.f32.gmra.mxu0 %v1255
    %v1389 = vpop.f32.mrf.mxu0
    %v1390 = vadd.f32 0.0, %v1389
    %v1391 = vpop.f32.mrf.mxu0
    %1392 = vmatprep.mubr.f32.mxu0 0.0
    %1393 = vmatmul.mubr.f32.gmra.mxu0 %v1256
    %v1394 = vpop.f32.mrf.mxu0
    %v1395 = vadd.f32 0.0, %v1394
    %v1396 = vpop.f32.mrf.mxu0
    %1397 = vmatprep.mubr.f32.mxu0 0.0
    %1398 = vmatmul.mubr.f32.gmra.mxu0 %v1257
    %v1399 = vpop.f32.mrf.mxu0
    %v1400 = vadd.f32 0.0, %v1399
    %v1401 = vpop.f32.mrf.mxu0
    %1402 = vmatprep.mubr.f32.mxu0 0.0
    %1403 = vmatmul.mubr.f32.gmra.mxu0 %v1258
    %v1404 = vpop.f32.mrf.mxu0
    %v1405 = vadd.f32 0.0, %v1404
    %v1406 = vpop.f32.mrf.mxu0
    %1407 = vdwg.mxu0
    %v1408 = vrot.slane %v1390, 6
    %v1409 = vrot.slane %v1395, 6
    %v1410 = vrot.slane %v1400, 6
    %v1411 = vrot.slane %v1405, 6
    %v1412 = vsel %vm60, %v1410, %v1411
    %v1413 = vsel %vm60, %v1409, %v1410
    %v1414 = vsel %vm60, %v1408, %v1409
    %v1415 = vsel %vm60, %v1411, %v1408
    %v1416 = vrot.slane %v1390, 7
    %v1417 = vrot.slane %v1395, 7
    %v1418 = vrot.slane %v1400, 7
    %v1419 = vrot.slane %v1405, 7
    %v1420 = vsel %vm93, %v1418, %v1419
    %v1421 = vsel %vm93, %v1417, %v1418
    %v1422 = vsel %vm93, %v1416, %v1417
    %v1423 = vsel %vm93, %v1419, %v1416
    %v1424 = vrot.slane %v1390, 1
    %v1425 = vrot.slane %v1395, 1
    %v1426 = vrot.slane %v1400, 1
    %v1427 = vrot.slane %v1405, 1
    %v1428 = vsel %vm126, %v1426, %v1427
    %v1429 = vsel %vm126, %v1425, %v1426
    %v1430 = vsel %vm126, %v1424, %v1425
    %v1431 = vsel %vm126, %v1427, %v1424
    %v1432 = vrot.slane %v1390, 2
    %v1433 = vrot.slane %v1395, 2
    %v1434 = vrot.slane %v1400, 2
    %v1435 = vrot.slane %v1405, 2
    %v1436 = vsel %vm159, %v1434, %v1435
    %v1437 = vsel %vm159, %v1433, %v1434
    %v1438 = vsel %vm159, %v1432, %v1433
    %v1439 = vsel %vm159, %v1435, %v1432
    %1444 = vrot.lane.b32.xlu0 %v1423, 8
    %v1445 = vpop.permute.xlu0 %1444
    %1446 = vrot.lane.b32.xlu0 %v1422, 8
    %v1447 = vpop.permute.xlu0 %1446
    %1448 = vrot.lane.b32.xlu0 %v1421, 8
    %v1449 = vpop.permute.xlu0 %1448
    %1450 = vrot.lane.b32.xlu0 %v1420, 8
    %v1451 = vpop.permute.xlu0 %1450
    %1460 = vrot.lane.b32.xlu0 %v1390, 16
    %v1461 = vpop.permute.xlu0 %1460
    %1462 = vrot.lane.b32.xlu0 %v1395, 16
    %v1463 = vpop.permute.xlu0 %1462
    %1464 = vrot.lane.b32.xlu0 %v1400, 16
    %v1465 = vpop.permute.xlu0 %1464
    %1466 = vrot.lane.b32.xlu0 %v1405, 16
    %v1467 = vpop.permute.xlu0 %1466
    %1476 = vrot.lane.b32.xlu0 %v1430, 24
    %v1477 = vpop.permute.xlu0 %1476
    %1478 = vrot.lane.b32.xlu0 %v1429, 24
    %v1479 = vpop.permute.xlu0 %1478
    %1480 = vrot.lane.b32.xlu0 %v1428, 24
    %v1481 = vpop.permute.xlu0 %1480
    %1482 = vrot.lane.b32.xlu0 %v1431, 24
    %v1483 = vpop.permute.xlu0 %1482
    %1492 = vrot.lane.b32.xlu0 %v1438, 32
    %v1493 = vpop.permute.xlu0 %1492
    %1494 = vrot.lane.b32.xlu0 %v1437, 32
    %v1495 = vpop.permute.xlu0 %1494
    %1496 = vrot.lane.b32.xlu0 %v1436, 32
    %v1497 = vpop.permute.xlu0 %1496
    %1498 = vrot.lane.b32.xlu0 %v1439, 32
    %v1499 = vpop.permute.xlu0 %1498
    %vm1504 = vcmask 64512
    %v1505 = vsel %vm1504, %v1415, %v1445
    %v1506 = vsel %vm1504, %v1414, %v1447
    %v1507 = vsel %vm1504, %v1413, %v1449
    %v1508 = vsel %vm1504, %v1412, %v1451
    %vm1509 = vcmask 130048
    %v1510 = vsel %vm1509, %v1505, %v1461
    %v1511 = vsel %vm1509, %v1506, %v1463
    %v1512 = vsel %vm1509, %v1507, %v1465
    %v1513 = vsel %vm1509, %v1508, %v1467
    %v1514 = vsel %vm449, %v1510, %v1477
    %v1515 = vsel %vm449, %v1511, %v1479
    %v1516 = vsel %vm449, %v1512, %v1481
    %v1517 = vsel %vm449, %v1513, %v1483
    %vm1518 = vcmask 261120
    %v1519 = vsel %vm1518, %v1514, %v1493
    %v1520 = vsel %vm1518, %v1515, %v1495
    %v1521 = vsel %vm1518, %v1516, %v1497
    %v1522 = vsel %vm1518, %v1517, %v1499
    %v1523 = vld [vmem:[#allocation2 + $0x1a0] sm:$0xff]
    %v1524 = vld [vmem:[#allocation2 + $0x1a8] sm:$0xff]
    %v1525 = vld [vmem:[#allocation2 + $0x1b0] sm:$0xff]
    %v1526 = vld [vmem:[#allocation2 + $0x1b8] sm:$0xff]
    %v1527 = vmul.f32 %v1519, %v1523
    %v1528 = vmul.f32 %v1520, %v1524
    %v1529 = vmul.f32 %v1521, %v1525
    %v1530 = vmul.f32 %v1522, %v1526
    %v1531 = vld [vmem:[#allocation2 + $0xc0] sm:$0xff]
    %v1532 = vld [vmem:[#allocation2 + $0xc8] sm:$0xff]
    %v1533 = vld [vmem:[#allocation2 + $0xd0] sm:$0xff]
    %v1534 = vld [vmem:[#allocation2 + $0xd8] sm:$0xff]
    %v1535 = vld [vmem:[#allocation2 + $0xe0] sm:$0xff]
    %v1536 = vld [vmem:[#allocation2 + $0xe8] sm:$0x1]
    %v1537 = vlaneseq
    %v1538 = vshrl.u32 %v1537, 7
    %v1539 = vsub.s32 0, %v1538
    %v1540 = vrot.slane %v1536, %v1539
    %vm1541 = vcmask 326656
    %v1543 = vsel %vm1541, %v1527, 0
    %v1546 = vsel %vm1541, %v1528, 0
    %v1549 = vsel %vm1541, %v1529, 0
    %v1552 = vsel %vm1541, %v1530, 0
    %1554 = vmatprep.subr.mxu0 0.0
    %1555 = vmatpush1.msra.mxu0 0.0
    %1556 = vmatprep.subr.mxu0 0.0
    %1557 = vmatpush1.msra.mxu0 0.0
    %1558 = vmatprep.subr.mxu0 0.0
    %1559 = vmatpush1.msra.mxu0 0.0
    %1560 = vmatprep.subr.mxu0 0.0
    %1561 = vmatpush1.msra.mxu0 0.0
    %1562 = vmatprep.subr.mxu0 0.0
    %1563 = vmatpush1.msra.mxu0 0.0
    %1564 = vmatprep.subr.mxu0 0.0
    %1565 = vmatpush1.msra.mxu0 0.0
    %1566 = vmatprep.subr.mxu0 0.0
    %1567 = vmatpush1.msra.mxu0 0.0
    %1568 = vmatprep.subr.mxu0 0.0
    %1569 = vmatpush1.msra.mxu0 0.0
    %1570 = vmatprep.subr.mxu0 0.0
    %1571 = vmatpush1.msra.mxu0 0.0
    %1572 = vmatprep.subr.mxu0 0.0
    %1573 = vmatpush1.msra.mxu0 0.0
    %1574 = vmatprep.subr.mxu0 0.0
    %1575 = vmatpush1.msra.mxu0 0.0
    %1576 = vmatprep.subr.mxu0 0.0
    %1577 = vmatpush1.msra.mxu0 %v1535
    %1578 = vmatprep.subr.mxu0 0.0
    %1579 = vmatpush1.msra.mxu0 %v1534
    %1580 = vmatprep.subr.mxu0 0.0
    %1581 = vmatpush1.msra.mxu0 %v1533
    %1582 = vmatprep.subr.mxu0 0.0
    %1583 = vmatpush1.msra.mxu0 %v1532
    %1584 = vmatprep.subr.mxu0 0.0
    %1585 = vmatpush1.msra.mxu0 %v1531
    %1586 = vmatprep.subr.mxu0 0.0
    %1587 = vmatpush2.msra.mxu0 0.0
    %1588 = vmatprep.subr.mxu0 0.0
    %1589 = vmatpush2.msra.mxu0 0.0
    %1590 = vmatprep.subr.mxu0 0.0
    %1591 = vmatpush2.msra.mxu0 0.0
    %1592 = vmatprep.subr.mxu0 0.0
    %1593 = vmatpush2.msra.mxu0 0.0
    %1594 = vmatprep.subr.mxu0 0.0
    %1595 = vmatpush2.msra.mxu0 0.0
    %1596 = vmatprep.subr.mxu0 0.0
    %1597 = vmatpush2.msra.mxu0 0.0
    %1598 = vmatprep.subr.mxu0 0.0
    %1599 = vmatpush2.msra.mxu0 0.0
    %1600 = vmatprep.subr.mxu0 0.0
    %1601 = vmatpush2.msra.mxu0 0.0
    %1602 = vmatprep.subr.mxu0 0.0
    %1603 = vmatpush2.msra.mxu0 0.0
    %1604 = vmatprep.subr.mxu0 0.0
    %1605 = vmatpush2.msra.mxu0 0.0
    %1606 = vmatprep.subr.mxu0 0.0
    %1607 = vmatpush2.msra.mxu0 0.0
    %1608 = vmatprep.subr.mxu0 0.0
    %1609 = vmatpush2.msra.mxu0 0.0
    %1610 = vmatprep.subr.mxu0 0.0
    %1611 = vmatpush2.msra.mxu0 0.0
    %1612 = vmatprep.subr.mxu0 0.0
    %1613 = vmatpush2.msra.mxu0 0.0
    %1614 = vmatprep.subr.mxu0 0.0
    %1615 = vmatpush2.msra.mxu0 0.0
    %1616 = vmatprep.subr.mxu0 0.0
    %1617 = vmatpush2.msra.mxu0 0.0
    %1618 = vmatprep.mubr.f32.mxu0 0.0
    %1619 = vmatmul.mubr.f32.gmra.mxu0 %v1543
    %v1620 = vpop.f32.mrf.mxu0
    %v1621 = vadd.f32 %v1540, %v1620
    %v1622 = vpop.f32.mrf.mxu0
    %1623 = vmatprep.mubr.f32.mxu0 0.0
    %1624 = vmatmul.mubr.f32.gmra.mxu0 %v1546
    %v1625 = vpop.f32.mrf.mxu0
    %v1626 = vadd.f32 %v1540, %v1625
    %v1627 = vpop.f32.mrf.mxu0
    %1628 = vmatprep.mubr.f32.mxu0 0.0
    %1629 = vmatmul.mubr.f32.gmra.mxu0 %v1549
    %v1630 = vpop.f32.mrf.mxu0
    %v1631 = vadd.f32 %v1540, %v1630
    %v1632 = vpop.f32.mrf.mxu0
    %1633 = vmatprep.mubr.f32.mxu0 0.0
    %1634 = vmatmul.mubr.f32.gmra.mxu0 %v1552
    %v1635 = vpop.f32.mrf.mxu0
    %v1636 = vadd.f32 %v1540, %v1635
    %v1637 = vpop.f32.mrf.mxu0
    %1638 = vdwg.mxu0
    %v1639 = vrot.slane %v1621, 1
    %v1640 = vrot.slane %v1626, 1
    %v1641 = vrot.slane %v1631, 1
    %v1642 = vrot.slane %v1636, 1
    %v1643 = vsel %vm126, %v1641, %v1642
    %v1644 = vsel %vm126, %v1640, %v1641
    %v1645 = vsel %vm126, %v1639, %v1640
    %v1646 = vsel %vm126, %v1642, %v1639
    %v1647 = vmax.f32 %v1621, %v1645
    %v1648 = vmax.f32 %v1626, %v1644
    %v1649 = vmax.f32 %v1631, %v1643
    %v1650 = vmax.f32 %v1636, %v1646
    %v1651 = vrot.slane %v1621, 2
    %v1652 = vrot.slane %v1626, 2
    %v1653 = vrot.slane %v1631, 2
    %v1654 = vrot.slane %v1636, 2
    %v1655 = vsel %vm159, %v1653, %v1654
    %v1656 = vsel %vm159, %v1652, %v1653
    %v1657 = vsel %vm159, %v1651, %v1652
    %v1658 = vsel %vm159, %v1654, %v1651
    %v1659 = vrot.slane %v1621, 3
    %v1660 = vrot.slane %v1626, 3
    %v1661 = vrot.slane %v1631, 3
    %v1662 = vrot.slane %v1636, 3
    %v1663 = vsel %vm1142, %v1661, %v1662
    %v1664 = vsel %vm1142, %v1660, %v1661
    %v1665 = vsel %vm1142, %v1659, %v1660
    %v1666 = vsel %vm1142, %v1662, %v1659
    %v1667 = vmax.f32 %v1657, %v1665
    %v1668 = vmax.f32 %v1656, %v1664
    %v1669 = vmax.f32 %v1655, %v1663
    %v1670 = vmax.f32 %v1658, %v1666
    %v1671 = vmax.f32 %v1647, %v1667
    %v1672 = vmax.f32 %v1648, %v1668
    %v1673 = vmax.f32 %v1649, %v1669
    %v1674 = vmax.f32 %v1650, %v1670
    %v1675 = vld [vmem:[#allocation2 + $0xf0] sm:$0x3]
    %v1677 = vsel %vm1518, %v1675, 0
    %1679 = vmatprep.subr.mxu0 0.0
    %1680 = vmatpush1.msra.mxu0 0.0
    %1681 = vmatprep.subr.mxu0 0.0
    %1682 = vmatpush1.msra.mxu0 0.0
    %1683 = vmatprep.subr.mxu0 0.0
    %1684 = vmatpush1.msra.mxu0 0.0
    %1685 = vmatprep.subr.mxu0 0.0
    %1686 = vmatpush1.msra.mxu0 0.0
    %1687 = vmatprep.subr.mxu0 0.0
    %1688 = vmatpush1.msra.mxu0 0.0
    %1689 = vmatprep.subr.mxu0 0.0
    %1690 = vmatpush1.msra.mxu0 0.0
    %1691 = vmatprep.subr.mxu0 0.0
    %1692 = vmatpush1.msra.mxu0 0.0
    %1693 = vmatprep.subr.mxu0 0.0
    %1694 = vmatpush1.msra.mxu0 0.0
    %1695 = vmatprep.subr.mxu0 0.0
    %1696 = vmatpush1.msra.mxu0 0.0
    %1697 = vmatprep.subr.mxu0 0.0
    %1698 = vmatpush1.msra.mxu0 0.0
    %1699 = vmatprep.subr.mxu0 0.0
    %1700 = vmatpush1.msra.mxu0 0.0
    %1701 = vmatprep.subr.mxu0 0.0
    %1702 = vmatpush1.msra.mxu0 0.0
    %1703 = vmatprep.subr.mxu0 0.0
    %1704 = vmatpush1.msra.mxu0 %v1674
    %1705 = vmatprep.subr.mxu0 0.0
    %1706 = vmatpush1.msra.mxu0 %v1673
    %1707 = vmatprep.subr.mxu0 0.0
    %1708 = vmatpush1.msra.mxu0 %v1672
    %1709 = vmatprep.subr.mxu0 0.0
    %1710 = vmatpush1.msra.mxu0 %v1671
    %1711 = vmatprep.subr.mxu0 0.0
    %1712 = vmatpush2.msra.mxu0 0.0
    %1713 = vmatprep.subr.mxu0 0.0
    %1714 = vmatpush2.msra.mxu0 0.0
    %1715 = vmatprep.subr.mxu0 0.0
    %1716 = vmatpush2.msra.mxu0 0.0
    %1717 = vmatprep.subr.mxu0 0.0
    %1718 = vmatpush2.msra.mxu0 0.0
    %1719 = vmatprep.subr.mxu0 0.0
    %1720 = vmatpush2.msra.mxu0 0.0
    %1721 = vmatprep.subr.mxu0 0.0
    %1722 = vmatpush2.msra.mxu0 0.0
    %1723 = vmatprep.subr.mxu0 0.0
    %1724 = vmatpush2.msra.mxu0 0.0
    %1725 = vmatprep.subr.mxu0 0.0
    %1726 = vmatpush2.msra.mxu0 0.0
    %1727 = vmatprep.subr.mxu0 0.0
    %1728 = vmatpush2.msra.mxu0 0.0
    %1729 = vmatprep.subr.mxu0 0.0
    %1730 = vmatpush2.msra.mxu0 0.0
    %1731 = vmatprep.subr.mxu0 0.0
    %1732 = vmatpush2.msra.mxu0 0.0
    %1733 = vmatprep.subr.mxu0 0.0
    %1734 = vmatpush2.msra.mxu0 0.0
    %1735 = vmatprep.subr.mxu0 0.0
    %1736 = vmatpush2.msra.mxu0 0.0
    %1737 = vmatprep.subr.mxu0 0.0
    %1738 = vmatpush2.msra.mxu0 0.0
    %1739 = vmatprep.subr.mxu0 0.0
    %1740 = vmatpush2.msra.mxu0 0.0
    %1741 = vmatprep.subr.mxu0 0.0
    %1742 = vmatpush2.msra.mxu0 0.0
    %1743 = vmatprep.mubr.f32.mxu0 0.0
    %1744 = vmatmul.mubr.f32.gmra.mxu0 %v1677
    %v1745 = vpop.f32.mrf.mxu0
    %v1746 = vadd.f32 0.0, %v1745
    %v1747 = vpop.f32.mrf.mxu0
    %1748 = vdwg.mxu0
    %v1749 = vsel %vm1509, %v1746, 0.0
    %1751 = vrot.lane.b32.xlu0 %v915, 68
    %v1752 = vpop.permute.xlu0 %1751
    %v1754 = vadd.f32 %v915, %v1752
    %v1755 = vmax.f32 %v915, %v1752
    %v1756 = vmax.f32 %v1754, %v1755
    %v1757 = vsub.f32 %v1754, %v1756
    %v1758 = vmul.f32 %v1757, 1.442695
    %v1759 = vpow.pop %v1758
    %v1760 = vmul.f32 %v1759, 2.0
    %v1761 = vsub.f32 %v915, %v1756
    %v1762 = vmul.f32 %v1761, 1.442695
    %v1763 = vpow.pop %v1762
    %v1764 = vadd.f32 %v1760, %v1763
    %1766 = vrot.lane.b32.xlu0 %v1756, 60
    %v1767 = vpop.permute.xlu0 %1766
    %v1769 = vsub.f32 %v915, %v1767
    %v1770 = vmul.f32 %v1769, 1.442695
    %v1771 = vpow.pop %v1770
    %1773 = vrot.lane.b32.xlu0 %v1771, 68
    %v1774 = vpop.permute.xlu0 %1773
    %v1776 = vadd.f32 %v1764, %v1774
    %v1777 = vlog2.pop %v1776
    %v1778 = vmul.f32 %v1777, 0.6931472
    %v1779 = vadd.f32 %v1756, %v1778
    %v1780 = vmax.f32 %v1755, 0.0
    %v1781 = vsub.f32 0.0, %v1780
    %v1782 = vmul.f32 %v1781, 1.442695
    %v1783 = vpow.pop %v1782
    %v1784 = vmul.f32 %v1783, 2.0
    %v1785 = vsub.f32 %v915, %v1780
    %v1786 = vmul.f32 %v1785, 1.442695
    %v1787 = vpow.pop %v1786
    %v1788 = vadd.f32 %v1784, %v1787
    %1790 = vrot.lane.b32.xlu0 %v1780, 60
    %v1791 = vpop.permute.xlu0 %1790
    %v1793 = vsub.f32 %v915, %v1791
    %v1794 = vmul.f32 %v1793, 1.442695
    %v1795 = vpow.pop %v1794
    %1797 = vrot.lane.b32.xlu0 %v1795, 68
    %v1798 = vpop.permute.xlu0 %1797
    %v1800 = vadd.f32 %v1788, %v1798
    %v1801 = vlog2.pop %v1800
    %v1802 = vmul.f32 %v1801, 0.6931472
    %v1803 = vadd.f32 %v1780, %v1802
    %v1804 = vsub.f32 %v1779, %v1803
    %1806 = vset.pattern.permute.xlu0 0
    %1807 = vperm.xlu0 %1806, %v41
    %v1808 = vpop.permute.xlu0 %1807
    %v1810 = vmul.f32 %v1808, %v1804
    %v1811 = vsub.f32 1.0, %v41
    %1813 = vset.pattern.permute.xlu0 0
    %1814 = vperm.xlu0 %1813, %v1811
    %v1815 = vpop.permute.xlu0 %1814
    %v1817 = vmul.f32 %v1815, %v915
    %1819 = vrot.lane.b32.xlu0 %v1817, 68
    %v1820 = vpop.permute.xlu0 %1819
    %v1822 = vadd.f32 %v1810, %v1820
    %v1824 = vrot.slane %v1822, 6
    %1825 = vrot.lane.b32.xlu0 %v1824, 90
    %v1826 = vpop.permute.xlu0 %1825
    %v1829 = vrot.slane %v1749, 4
    %1830 = vrot.lane.b32.xlu0 %v1829, 90
    %v1831 = vpop.permute.xlu0 %1830
    %v1833 = vrot.slane %v915, 2
    %1834 = vrot.lane.b32.xlu0 %v1833, 60
    %v1835 = vpop.permute.xlu0 %1834
    %vm1837 = vcmask 1041408
    %v1838 = vsel %vm1837, %v915, %v1826
    %v1839 = vsel %vm594, %v1838, %v1831
    %vm1840 = vcmask 1045504
    %v1841 = vsel %vm1840, %v1839, %v1835
    %v1842 = vld [vmem:[#allocation2 + $0xf8] sm:$0xff]
    %v1843 = vld [vmem:[#allocation2 + $0x100] sm:$0xff]
    %v1844 = vld [vmem:[#allocation2 + $0x108] sm:$0xff]
    %v1845 = vld [vmem:[#allocation2 + $0x110] sm:$0x3f]
    %v1846 = vld [vmem:[#allocation2 + $0x118] sm:$0x1]
    %v1847 = vlaneseq
    %v1848 = vshrl.u32 %v1847, 7
    %v1849 = vsub.s32 0, %v1848
    %v1850 = vrot.slane %v1846, %v1849
    %1852 = vrot.lane.b32.xlu0 %v1841, 38
    %v1853 = vpop.permute.xlu0 %1852
    %vm1854 = vcmask 244736
    %v1855 = vsel %vm1854, %v1853, 0
    %v1858 = vsel %vm1840, %v1845, 0
    %1860 = vmatprep.subr.mxu0 0.0
    %1861 = vmatpush1.msra.mxu0 0.0
    %1862 = vmatprep.subr.mxu0 0.0
    %1863 = vmatpush1.msra.mxu0 0.0
    %1864 = vmatprep.subr.mxu0 0.0
    %1865 = vmatpush1.msra.mxu0 0.0
    %1866 = vmatprep.subr.mxu0 0.0
    %1867 = vmatpush1.msra.mxu0 0.0
    %1868 = vmatprep.subr.mxu0 0.0
    %1869 = vmatpush1.msra.mxu0 0.0
    %1870 = vmatprep.subr.mxu0 0.0
    %1871 = vmatpush1.msra.mxu0 0.0
    %1872 = vmatprep.subr.mxu0 0.0
    %1873 = vmatpush1.msra.mxu0 0.0
    %1874 = vmatprep.subr.mxu0 0.0
    %1875 = vmatpush1.msra.mxu0 0.0
    %1876 = vmatprep.subr.mxu0 0.0
    %1877 = vmatpush1.msra.mxu0 0.0
    %1878 = vmatprep.subr.mxu0 0.0
    %1879 = vmatpush1.msra.mxu0 0.0
    %1880 = vmatprep.subr.mxu0 0.0
    %1881 = vmatpush1.msra.mxu0 0.0
    %1882 = vmatprep.subr.mxu0 0.0
    %1883 = vmatpush1.msra.mxu0 0.0
    %1884 = vmatprep.subr.mxu0 0.0
    %1885 = vmatpush1.msra.mxu0 %v1858
    %1886 = vmatprep.subr.mxu0 0.0
    %1887 = vmatpush1.msra.mxu0 %v1844
    %1888 = vmatprep.subr.mxu0 0.0
    %1889 = vmatpush1.msra.mxu0 %v1843
    %1890 = vmatprep.subr.mxu0 0.0
    %1891 = vmatpush1.msra.mxu0 %v1842
    %1892 = vmatprep.subr.mxu0 0.0
    %1893 = vmatpush2.msra.mxu0 0.0
    %1894 = vmatprep.subr.mxu0 0.0
    %1895 = vmatpush2.msra.mxu0 0.0
    %1896 = vmatprep.subr.mxu0 0.0
    %1897 = vmatpush2.msra.mxu0 0.0
    %1898 = vmatprep.subr.mxu0 0.0
    %1899 = vmatpush2.msra.mxu0 0.0
    %1900 = vmatprep.subr.mxu0 0.0
    %1901 = vmatpush2.msra.mxu0 0.0
    %1902 = vmatprep.subr.mxu0 0.0
    %1903 = vmatpush2.msra.mxu0 0.0
    %1904 = vmatprep.subr.mxu0 0.0
    %1905 = vmatpush2.msra.mxu0 0.0
    %1906 = vmatprep.subr.mxu0 0.0
    %1907 = vmatpush2.msra.mxu0 0.0
    %1908 = vmatprep.subr.mxu0 0.0
    %1909 = vmatpush2.msra.mxu0 0.0
    %1910 = vmatprep.subr.mxu0 0.0
    %1911 = vmatpush2.msra.mxu0 0.0
    %1912 = vmatprep.subr.mxu0 0.0
    %1913 = vmatpush2.msra.mxu0 0.0
    %1914 = vmatprep.subr.mxu0 0.0
    %1915 = vmatpush2.msra.mxu0 0.0
    %1916 = vmatprep.subr.mxu0 0.0
    %1917 = vmatpush2.msra.mxu0 0.0
    %1918 = vmatprep.subr.mxu0 0.0
    %1919 = vmatpush2.msra.mxu0 0.0
    %1920 = vmatprep.subr.mxu0 0.0
    %1921 = vmatpush2.msra.mxu0 0.0
    %1922 = vmatprep.subr.mxu0 0.0
    %1923 = vmatpush2.msra.mxu0 0.0
    %1924 = vmatprep.mubr.f32.mxu0 0.0
    %1925 = vmatmul.mubr.f32.gmra.mxu0 %v1855
    %v1926 = vpop.f32.mrf.mxu0
    %v1927 = vadd.f32 %v1850, %v1926
    %v1928 = vpop.f32.mrf.mxu0
    %1929 = vdwg.mxu0
    %v1930 = vld [vmem:[#allocation2 + $0x1c0] sm:$0x3]
    %v1931 = vmul.f32 %v1808, %v1930
    %v1932 = vld [vmem:[#allocation2 + $0x1c8] sm:$0x3]
    %v1933 = vmul.f32 %v1815, %v1932
    %v1934 = vadd.f32 %v1931, %v1933
    %v1936 = vsel %vm1504, %v1934, 0
    %1938 = vmatprep.subr.mxu0 0.0
    %1939 = vmatpush1.msra.mxu0 0.0
    %1940 = vmatprep.subr.mxu0 0.0
    %1941 = vmatpush1.msra.mxu0 0.0
    %1942 = vmatprep.subr.mxu0 0.0
    %1943 = vmatpush1.msra.mxu0 0.0
    %1944 = vmatprep.subr.mxu0 0.0
    %1945 = vmatpush1.msra.mxu0 0.0
    %1946 = vmatprep.subr.mxu0 0.0
    %1947 = vmatpush1.msra.mxu0 0.0
    %1948 = vmatprep.subr.mxu0 0.0
    %1949 = vmatpush1.msra.mxu0 0.0
    %1950 = vmatprep.subr.mxu0 0.0
    %1951 = vmatpush1.msra.mxu0 0.0
    %1952 = vmatprep.subr.mxu0 0.0
    %1953 = vmatpush1.msra.mxu0 0.0
    %1954 = vmatprep.subr.mxu0 0.0
    %1955 = vmatpush1.msra.mxu0 0.0
    %1956 = vmatprep.subr.mxu0 0.0
    %1957 = vmatpush1.msra.mxu0 0.0
    %1958 = vmatprep.subr.mxu0 0.0
    %1959 = vmatpush1.msra.mxu0 0.0
    %1960 = vmatprep.subr.mxu0 0.0
    %1961 = vmatpush1.msra.mxu0 0.0
    %1962 = vmatprep.subr.mxu0 0.0
    %1963 = vmatpush1.msra.mxu0 0.0
    %1964 = vmatprep.subr.mxu0 0.0
    %1965 = vmatpush1.msra.mxu0 0.0
    %1966 = vmatprep.subr.mxu0 0.0
    %1967 = vmatpush1.msra.mxu0 0.0
    %1968 = vmatprep.subr.mxu0 0.0
    %1969 = vmatpush1.msra.mxu0 %v1927
    %1970 = vmatprep.subr.mxu0 0.0
    %1971 = vmatpush2.msra.mxu0 0.0
    %1972 = vmatprep.subr.mxu0 0.0
    %1973 = vmatpush2.msra.mxu0 0.0
    %1974 = vmatprep.subr.mxu0 0.0
    %1975 = vmatpush2.msra.mxu0 0.0
    %1976 = vmatprep.subr.mxu0 0.0
    %1977 = vmatpush2.msra.mxu0 0.0
    %1978 = vmatprep.subr.mxu0 0.0
    %1979 = vmatpush2.msra.mxu0 0.0
    %1980 = vmatprep.subr.mxu0 0.0
    %1981 = vmatpush2.msra.mxu0 0.0
    %1982 = vmatprep.subr.mxu0 0.0
    %1983 = vmatpush2.msra.mxu0 0.0
    %1984 = vmatprep.subr.mxu0 0.0
    %1985 = vmatpush2.msra.mxu0 0.0
    %1986 = vmatprep.subr.mxu0 0.0
    %1987 = vmatpush2.msra.mxu0 0.0
    %1988 = vmatprep.subr.mxu0 0.0
    %1989 = vmatpush2.msra.mxu0 0.0
    %1990 = vmatprep.subr.mxu0 0.0
    %1991 = vmatpush2.msra.mxu0 0.0
    %1992 = vmatprep.subr.mxu0 0.0
    %1993 = vmatpush2.msra.mxu0 0.0
    %1994 = vmatprep.subr.mxu0 0.0
    %1995 = vmatpush2.msra.mxu0 0.0
    %1996 = vmatprep.subr.mxu0 0.0
    %1997 = vmatpush2.msra.mxu0 0.0
    %1998 = vmatprep.subr.mxu0 0.0
    %1999 = vmatpush2.msra.mxu0 0.0
    %2000 = vmatprep.subr.mxu0 0.0
    %2001 = vmatpush2.msra.mxu0 0.0
    %2002 = vmatprep.mubr.f32.mxu0 0.0
    %2003 = vmatmul.mubr.f32.gmra.mxu0 %v1936
    %v2004 = vpop.f32.mrf.mxu0
    %v2005 = vadd.f32 0.0, %v2004
    %v2006 = vpop.f32.mrf.mxu0
    %2007 = vdwg.mxu0
    %2009 = vrot.lane.b32.xlu0 %v2005, 16
    %v2010 = vpop.permute.xlu0 %2009
    %2012 = vrot.lane.b32.xlu0 %v2005, 32
    %v2013 = vpop.permute.xlu0 %2012
    %v2015 = vsel %vm1509, %v2005, %v2010
    %v2016 = vsel %vm1518, %v2015, %v2013
    %v2018 = vrot.slane %v2016, 6
    %v2020 = vrot.slane %v2016, 4
    %v2022 = vrot.slane %v2016, 2
    %v2024 = vsel %vm1837, %v2016, %v2018
    %v2025 = vsel %vm594, %v2024, %v2020
    %v2026 = vsel %vm1840, %v2025, %v2022
    %2028 = vrot.lane.b32.xlu0 %v2026, 32
    %v2029 = vpop.permute.xlu0 %2028
    %v2031 = vmul.f32 %v1927, %v2029
    %v2032 = vld [vmem:[#allocation2 + $0x1d8] sm:$0xff]
    %v2033 = vld [vmem:[#allocation2 + $0x1e0] sm:$0xff]
    %v2034 = vld [vmem:[#allocation2 + $0x1e8] sm:$0xff]
    %v2035 = vld [vmem:[#allocation2 + $0x1f0] sm:$0xff]
    %v2036 = vld [vmem:[#allocation2 + $0x1f8] sm:$0xff]
    %v2037 = vld [vmem:[#allocation2 + $0x200] sm:$0xff]
    %2039 = vrot.lane.b32.xlu0 %v2031, 96
    %v2040 = vpop.permute.xlu0 %2039
    %v2041 = vsel %vm483, %v2040, 0
    %2043 = vmatprep.subr.mxu0 0.0
    %2044 = vmatpush1.msra.mxu0 0.0
    %2045 = vmatprep.subr.mxu0 0.0
    %2046 = vmatpush1.msra.mxu0 0.0
    %2047 = vmatprep.subr.mxu0 0.0
    %2048 = vmatpush1.msra.mxu0 0.0
    %2049 = vmatprep.subr.mxu0 0.0
    %2050 = vmatpush1.msra.mxu0 0.0
    %2051 = vmatprep.subr.mxu0 0.0
    %2052 = vmatpush1.msra.mxu0 0.0
    %2053 = vmatprep.subr.mxu0 0.0
    %2054 = vmatpush1.msra.mxu0 0.0
    %2055 = vmatprep.subr.mxu0 0.0
    %2056 = vmatpush1.msra.mxu0 0.0
    %2057 = vmatprep.subr.mxu0 0.0
    %2058 = vmatpush1.msra.mxu0 0.0
    %2059 = vmatprep.subr.mxu0 0.0
    %2060 = vmatpush1.msra.mxu0 0.0
    %2061 = vmatprep.subr.mxu0 0.0
    %2062 = vmatpush1.msra.mxu0 0.0
    %2063 = vmatprep.subr.mxu0 0.0
    %2064 = vmatpush1.msra.mxu0 %v2037
    %2065 = vmatprep.subr.mxu0 0.0
    %2066 = vmatpush1.msra.mxu0 %v2036
    %2067 = vmatprep.subr.mxu0 0.0
    %2068 = vmatpush1.msra.mxu0 %v2035
    %2069 = vmatprep.subr.mxu0 0.0
    %2070 = vmatpush1.msra.mxu0 %v2034
    %2071 = vmatprep.subr.mxu0 0.0
    %2072 = vmatpush1.msra.mxu0 %v2033
    %2073 = vmatprep.subr.mxu0 0.0
    %2074 = vmatpush1.msra.mxu0 %v2032
    %2075 = vmatprep.subr.mxu0 0.0
    %2076 = vmatpush2.msra.mxu0 0.0
    %2077 = vmatprep.subr.mxu0 0.0
    %2078 = vmatpush2.msra.mxu0 0.0
    %2079 = vmatprep.subr.mxu0 0.0
    %2080 = vmatpush2.msra.mxu0 0.0
    %2081 = vmatprep.subr.mxu0 0.0
    %2082 = vmatpush2.msra.mxu0 0.0
    %2083 = vmatprep.subr.mxu0 0.0
    %2084 = vmatpush2.msra.mxu0 0.0
    %2085 = vmatprep.subr.mxu0 0.0
    %2086 = vmatpush2.msra.mxu0 0.0
    %2087 = vmatprep.subr.mxu0 0.0
    %2088 = vmatpush2.msra.mxu0 0.0
    %2089 = vmatprep.subr.mxu0 0.0
    %2090 = vmatpush2.msra.mxu0 0.0
    %2091 = vmatprep.subr.mxu0 0.0
    %2092 = vmatpush2.msra.mxu0 0.0
    %2093 = vmatprep.subr.mxu0 0.0
    %2094 = vmatpush2.msra.mxu0 0.0
    %2095 = vmatprep.subr.mxu0 0.0
    %2096 = vmatpush2.msra.mxu0 0.0
    %2097 = vmatprep.subr.mxu0 0.0
    %2098 = vmatpush2.msra.mxu0 0.0
    %2099 = vmatprep.subr.mxu0 0.0
    %2100 = vmatpush2.msra.mxu0 0.0
    %2101 = vmatprep.subr.mxu0 0.0
    %2102 = vmatpush2.msra.mxu0 0.0
    %2103 = vmatprep.subr.mxu0 0.0
    %2104 = vmatpush2.msra.mxu0 0.0
    %2105 = vmatprep.subr.mxu0 0.0
    %2106 = vmatpush2.msra.mxu0 0.0
    %2107 = vmatprep.mubr.f32.mxu0 0.0
    %2108 = vmatmul.mubr.f32.gmra.mxu0 %v2041
    %v2109 = vpop.f32.mrf.mxu0
    %v2110 = vadd.f32 0.0, %v2109
    %v2111 = vpop.f32.mrf.mxu0
    %2112 = vdwg.mxu0
    %v2113 = vmul.f32 %v2110, 0.25
    %v2114 = vrot.slane %v41, 6
    %v2116 = vrot.slane %v41, 4
    %v2118 = vrot.slane %v41, 2
    %v2120 = vsel %vm1837, %v41, %v2114
    %v2121 = vsel %vm594, %v2120, %v2116
    %v2122 = vsel %vm1840, %v2121, %v2118
    %vm2123 = vcmp.lt.f32.partialorder %v2122, 0.5
    %v2124 = vsel %vm2123, -1e+30, 0.0
    %v2125 = vld [vmem:[#allocation2 + $0x208] sm:$0xff]
    %v2126 = vmul.f32 %v2124, %v2125
    %2128 = vset.pattern.permute.xlu0 0
    %2129 = vperm.xlu0 %2128, %v2126
    %v2130 = vpop.permute.xlu0 %2129
    %v2132 = vadd.f32 %v2113, %v2130
    %vm2133 = vcmask 23552
    %v2134 = vsel %vm2133, %v2132, -inf
    %v2135 = vrot.slane %v2134, 4
    %v2136 = vmax.f32 %v2134, %v2135
    %v2137 = vrot.slane %v2136, 2
    %v2138 = vmax.f32 %v2136, %v2137
    %v2139 = vrot.slane %v2138, 1
    %v2140 = vmax.f32 %v2138, %v2139
    %v2141 = vsub.f32 %v2132, %v2140
    %v2142 = vmul.f32 %v2141, 1.442695
    %v2143 = vpow.pop %v2142
    %2145 = vrot.lane.b32.xlu0 %v1927, 48
    %v2146 = vpop.permute.xlu0 %2145
    %v2148 = vmul.f32 %v2143, %v2146
    %2150 = vrot.lane.b32.xlu0 %v2143, 3
    %v2151 = vpop.permute.xlu0 %2150
    %v2153 = vsel %vm2133, %v2148, %v2151
    %v2154 = vld [vmem:[#allocation2 + $0x1d0] sm:$0x3]
    %v2156 = vsel %vm1504, %v2154, 0
    %2158 = vmatprep.subr.mxu0 0.0
    %2159 = vmatpush1.msra.mxu0 0.0
    %2160 = vmatprep.subr.mxu0 0.0
    %2161 = vmatpush1.msra.mxu0 0.0
    %2162 = vmatprep.subr.mxu0 0.0
    %2163 = vmatpush1.msra.mxu0 0.0
    %2164 = vmatprep.subr.mxu0 0.0
    %2165 = vmatpush1.msra.mxu0 0.0
    %2166 = vmatprep.subr.mxu0 0.0
    %2167 = vmatpush1.msra.mxu0 0.0
    %2168 = vmatprep.subr.mxu0 0.0
    %2169 = vmatpush1.msra.mxu0 0.0
    %2170 = vmatprep.subr.mxu0 0.0
    %2171 = vmatpush1.msra.mxu0 0.0
    %2172 = vmatprep.subr.mxu0 0.0
    %2173 = vmatpush1.msra.mxu0 0.0
    %2174 = vmatprep.subr.mxu0 0.0
    %2175 = vmatpush1.msra.mxu0 0.0
    %2176 = vmatprep.subr.mxu0 0.0
    %2177 = vmatpush1.msra.mxu0 0.0
    %2178 = vmatprep.subr.mxu0 0.0
    %2179 = vmatpush1.msra.mxu0 0.0
    %2180 = vmatprep.subr.mxu0 0.0
    %2181 = vmatpush1.msra.mxu0 0.0
    %2182 = vmatprep.subr.mxu0 0.0
    %2183 = vmatpush1.msra.mxu0 0.0
    %2184 = vmatprep.subr.mxu0 0.0
    %2185 = vmatpush1.msra.mxu0 0.0
    %2186 = vmatprep.subr.mxu0 0.0
    %2187 = vmatpush1.msra.mxu0 0.0
    %2188 = vmatprep.subr.mxu0 0.0
    %2189 = vmatpush1.msra.mxu0 %v2153
    %2190 = vmatprep.subr.mxu0 0.0
    %2191 = vmatpush2.msra.mxu0 0.0
    %2192 = vmatprep.subr.mxu0 0.0
    %2193 = vmatpush2.msra.mxu0 0.0
    %2194 = vmatprep.subr.mxu0 0.0
    %2195 = vmatpush2.msra.mxu0 0.0
    %2196 = vmatprep.subr.mxu0 0.0
    %2197 = vmatpush2.msra.mxu0 0.0
    %2198 = vmatprep.subr.mxu0 0.0
    %2199 = vmatpush2.msra.mxu0 0.0
    %2200 = vmatprep.subr.mxu0 0.0
    %2201 = vmatpush2.msra.mxu0 0.0
    %2202 = vmatprep.subr.mxu0 0.0
    %2203 = vmatpush2.msra.mxu0 0.0
    %2204 = vmatprep.subr.mxu0 0.0
    %2205 = vmatpush2.msra.mxu0 0.0
    %2206 = vmatprep.subr.mxu0 0.0
    %2207 = vmatpush2.msra.mxu0 0.0
    %2208 = vmatprep.subr.mxu0 0.0
    %2209 = vmatpush2.msra.mxu0 0.0
    %2210 = vmatprep.subr.mxu0 0.0
    %2211 = vmatpush2.msra.mxu0 0.0
    %2212 = vmatprep.subr.mxu0 0.0
    %2213 = vmatpush2.msra.mxu0 0.0
    %2214 = vmatprep.subr.mxu0 0.0
    %2215 = vmatpush2.msra.mxu0 0.0
    %2216 = vmatprep.subr.mxu0 0.0
    %2217 = vmatpush2.msra.mxu0 0.0
    %2218 = vmatprep.subr.mxu0 0.0
    %2219 = vmatpush2.msra.mxu0 0.0
    %2220 = vmatprep.subr.mxu0 0.0
    %2221 = vmatpush2.msra.mxu0 0.0
    %2222 = vmatprep.mubr.f32.mxu0 0.0
    %2223 = vmatmul.mubr.f32.gmra.mxu0 %v2156
    %v2224 = vpop.f32.mrf.mxu0
    %v2225 = vadd.f32 0.0, %v2224
    %v2226 = vpop.f32.mrf.mxu0
    %2227 = vdwg.mxu0
    %2229 = vrot.lane.b32.xlu0 %v2225, 125
    %v2230 = vpop.permute.xlu0 %2229
    %v2232 = vrcp.pop %v2230
    %v2233 = vmul.f32 %v2225, %v2232
    %v2234 = vsel %vm2133, %v2233, 0.0
    %v2235 = vsel %vm1837, %v2234, 0.0
    %2236 = vst [vmem:[%s2] sm:$0xff] %v2235
    // Predicated region
    $region14: #{forward.1} parent=1 // pred_check
      _
    $region15: #{forward.1} parent=1 // pred_check_branch
      %2238 = sbr.rel (0) target = $region17
    $region16: #{forward.1} parent=1 // pred_region
      _
    $region17: #{forward.1} parent=1 // pred_fallthru
      _
    // Predicated region
    $region18: #{forward.1} parent=1 // pred_check
      _
    $region19: #{forward.1} parent=1 // pred_check_branch
      %2240 = sbr.rel (0) target = $region21
    $region20: #{forward.1} parent=1 // pred_region
      _
    $region21: #{forward.1} parent=1 // pred_fallthru
      _
    %2241 = vsyncpa [#allocation3], 1

</llo_original>
